<compile_context>
chip_gen: v7x
topology: tpu7x:2x2x1
jax: 0.10.0
libtpu: 0.0.40
codegen_flags: <defaults>
</compile_context>

<pallas_src>
import jax
import jax.numpy as jnp
from jax import lax
from jax.experimental import pallas as pl
from jax.experimental.pallas import tpu as pltpu


def _round_up(n, m):
    return ((n + m - 1) // m) * m


def _make_kernel(T_real, Tc, compute_dtype, unroll):
    """Kernel for one (batch tile, time chunk) grid point.

    Grid: (batch tiles ["parallel"], time chunks ["arbitrary"]).  The hidden
    state is carried across time chunks in an f32 VMEM scratch and in registers
    (fori_loop carry) inside a chunk.
    """

    def kernel(x_ref, h0_ref, wih_ref, whh_ref, b_ref, out_ref,
               h_scratch, xw_scratch):
        tc = pl.program_id(1)

        @pl.when(tc == 0)
        def _():
            h_scratch[...] = h0_ref[...].astype(jnp.float32)

        Tc_, BB, Dp = x_ref.shape
        Hp = whh_ref.shape[0]

        # Hoisted, MXU-filling input projection over the whole time chunk,
        # f32 accumulation, bias folded in (one broadcast, outside the loop).
        x_flat = x_ref[...].reshape(Tc_ * BB, Dp)          # BB % 8 == 0 -> free reshape
        xw = jnp.dot(x_flat, wih_ref[...], preferred_element_type=jnp.float32)
        xw = xw + b_ref[...].astype(jnp.float32)
        xw_scratch[...] = xw.reshape(Tc_, BB, Hp)

        w_hh = whh_ref[...]                                 # (Hp, Hp), compute dtype
        # Number of real (non-padded) timesteps in this chunk.
        valid = T_real - tc * Tc

        def step(i, h):
            z = xw_scratch[i] + jnp.dot(h.astype(compute_dtype), w_hh,
                                        preferred_element_type=jnp.float32)
            h_new = jnp.tanh(z)
            # Padded tail steps: keep the hidden state unchanged.
            return jnp.where(i < valid, h_new, h)

        h = lax.fori_loop(0, Tc_, step, h_scratch[...], unroll=unroll)
        h_scratch[...] = h

        @pl.when(tc == pl.num_programs(1) - 1)
        def _():
            out_ref[...] = h.astype(out_ref.dtype)

    return kernel


def _build_call(kernel, *, Tc, BB, Dp, Hp, Tp, Bp, out_dtype, vmem_limit,
                single_buffer_weights):
    # Constant-index blocks (weights / bias) never change across the grid ->
    # single-buffer them to halve their VMEM footprint.
    const_kw = {"pipeline_mode": pl.Buffered(1)} if single_buffer_weights else {}
    in_specs = [
        pl.BlockSpec((Tc, BB, Dp), lambda bi, tc: (tc, bi, 0)),          # x chunk
        pl.BlockSpec((BB, Hp), lambda bi, tc: (bi, 0)),                  # init_state
        pl.BlockSpec((Dp, Hp), lambda bi, tc: (0, 0), **const_kw),       # W_ih
        pl.BlockSpec((Hp, Hp), lambda bi, tc: (0, 0), **const_kw),       # W_hh
        pl.BlockSpec((1, Hp), lambda bi, tc: (0, 0), **const_kw),        # bias
    ]
    return pl.pallas_call(
        kernel,
        out_shape=jax.ShapeDtypeStruct((Bp, Hp), out_dtype),
        grid_spec=pltpu.PrefetchScalarGridSpec(
            num_scalar_prefetch=0,
            grid=(Bp // BB, Tp // Tc),
            in_specs=in_specs,
            out_specs=pl.BlockSpec((BB, Hp), lambda bi, tc: (bi, 0)),
            scratch_shapes=[
                pltpu.VMEM((BB, Hp), jnp.float32),        # hidden-state carry
                pltpu.VMEM((Tc, BB, Hp), jnp.float32),    # hoisted x @ W_ih + b
            ],
        ),
        compiler_params=pltpu.CompilerParams(
            dimension_semantics=("parallel", "arbitrary"),  # batch parallel, time serial
            vmem_limit_bytes=vmem_limit,
        ),
    )


def rnn_cell_forward(inputs, init_state, W_ih, W_hh, bias_hh, *,
                     time_chunk=32, batch_tile=None, use_bf16=True):
    """Pallas equivalent of RNNcell.forward; returns (h_T, h_T)."""
    T, B, D_in = inputs.shape
    H = W_hh.shape[0]

    if T == 0:  # PyTorch loop never runs -> h_t == init_state
        return init_state, init_state

    out_dtype = inputs.dtype
    compute_dtype = jnp.bfloat16 if use_bf16 else jnp.float32

    # Lane/sublane-aligned padded shapes.
    Hp = _round_up(H, 128)
    Dp = _round_up(D_in, 128)
    Bp = _round_up(B, 8)

    # Fixed time chunk; pad T up to a multiple of it and mask the tail in-kernel.
    Tc = min(max(int(time_chunk), 1), T)
    Tp = _round_up(T, Tc)

    # Batch tile: full (padded) batch by default.  Only split (e.g. for v7x's
    # 2 TensorCores) when the per-core tile stays a multiple of 8.
    BB = Bp if batch_tile is None else int(batch_tile)
    assert Bp % BB == 0 and BB % 8 == 0, "batch_tile must divide padded batch and be a multiple of 8"

    # Zero-pad inputs/params.  Padded hidden lanes stay exactly 0 through the
    # recurrence; padded batch rows are sliced off at the end.
    x = jnp.zeros((Tp, Bp, Dp), compute_dtype).at[:T, :B, :D_in].set(
        inputs.astype(compute_dtype))
    h0 = jnp.zeros((Bp, Hp), jnp.float32).at[:B, :H].set(
        init_state.astype(jnp.float32))
    wih = jnp.zeros((Dp, Hp), compute_dtype).at[:D_in, :H].set(
        W_ih.astype(compute_dtype))
    whh = jnp.zeros((Hp, Hp), compute_dtype).at[:H, :H].set(
        W_hh.astype(compute_dtype))
    b2d = jnp.zeros((1, Hp), jnp.float32).at[0, :H].set(
        bias_hh.astype(jnp.float32))

    # VMEM budget from the actual tiles (weights single-buffered, resident).
    cdt = jnp.dtype(compute_dtype).itemsize
    odt = jnp.dtype(out_dtype).itemsize
    vmem_needed = (
        2 * Tc * BB * Dp * cdt        # x chunk (double-buffered)
        + Dp * Hp * cdt               # W_ih (single-buffered)
        + Hp * Hp * cdt               # W_hh (single-buffered)
        + Hp * 4                      # bias
        + 2 * BB * Hp * 4             # init_state (double-buffered)
        + 2 * BB * Hp * odt           # output (double-buffered)
        + BB * Hp * 4                 # h carry scratch
        + Tc * BB * Hp * 4            # hoisted-projection scratch
    )
    try:
        phys = pltpu.get_tpu_info().vmem_capacity_bytes  # 64 MiB v7x, 128 MiB v5e/v6e
        vmem_cap = min(int(phys * 0.85), 100 << 20)
    except Exception:
        vmem_cap = 48 << 20  # conservative fallback that fits every generation
    vmem_limit = int(min(max(vmem_needed + (2 << 20), 16 << 20), vmem_cap))

    unroll = max(1, min(Tc, 8))  # partial unroll: limits vreg pressure for big BB*Hp
    kernel = _make_kernel(T, Tc, compute_dtype, unroll)

    call_kwargs = dict(Tc=Tc, BB=BB, Dp=Dp, Hp=Hp, Tp=Tp, Bp=Bp,
                       out_dtype=out_dtype, vmem_limit=vmem_limit)
    try:
        h_pad = _build_call(kernel, single_buffer_weights=True,
                            **call_kwargs)(x, h0, wih, whh, b2d)
    except Exception:
        # pipeline_mode=pl.Buffered(1) not supported on this jax version:
        # fall back to default double-buffered weights.
        h_pad = _build_call(kernel, single_buffer_weights=False,
                            **call_kwargs)(x, h0, wih, whh, b2d)

    h_final = h_pad[:B, :H]
    return h_final, h_final


def xavier_uniform(key, shape, dtype=jnp.float32):
    fan_in, fan_out = shape
    limit = (6.0 / (fan_in + fan_out)) ** 0.5
    return jax.random.uniform(key, shape, dtype, minval=-limit, maxval=limit)


def reference_forward(inputs, init_state, W_ih, W_hh, bias_hh):
    h = init_state
    for t in range(inputs.shape[0]):
        h = jnp.tanh(inputs[t] @ W_ih + h @ W_hh + bias_hh)
    return h, h


if __name__ == "__main__":
    key = jax.random.PRNGKey(0)
    k_x, k_h, k_wih, k_whh = jax.random.split(key, 4)

    T, B, D_in, H = 8, 4, 16, 32

    inputs = jax.random.normal(k_x, (T, B, D_in), jnp.float32)
    init_state = jax.random.normal(k_h, (B, H), jnp.float32)

    # Deterministic parameter init matching the module (xavier_uniform, zeros bias).
    W_ih = xavier_uniform(k_wih, (D_in, H))
    W_hh = xavier_uniform(k_whh, (H, H))
    bias_hh = jnp.zeros((H,), jnp.float32)

    h_ref, _ = reference_forward(inputs, init_state, W_ih, W_hh, bias_hh)

    # Fast path: bf16 MXU operands, f32 accumulation / carry / tanh.
    # (Operand-precision error compounds over very long T; keep f32 for that.)
    h_bf16, _ = rnn_cell_forward(inputs, init_state, W_ih, W_hh, bias_hh, use_bf16=True)
    jax.block_until_ready(h_bf16)
    assert h_bf16.shape == (B, H)
    assert jnp.allclose(h_bf16, h_ref, atol=3e-2, rtol=3e-2), "bf16 path mismatch vs reference"

    # Exact path: pure f32 matches the PyTorch semantics tightly.
    h_f32, _ = rnn_cell_forward(inputs, init_state, W_ih, W_hh, bias_hh, use_bf16=False)
    jax.block_until_ready(h_f32)
    assert jnp.allclose(h_f32, h_ref, atol=1e-5, rtol=1e-5), "f32 path mismatch vs reference"

    print("KERNEL_OK")
</pallas_src>

<mosaic_0001>
module attributes {stable_mosaic.version = 11 : i64} {
  func.func @kernel(%arg0: i32, %arg1: i32, %arg2: memref<8x8x128xbf16, #tpu.memory_space<vmem>>, %arg3: memref<8x128xf32, #tpu.memory_space<vmem>>, %arg4: memref<128x128xbf16, #tpu.memory_space<vmem>>, %arg5: memref<128x128xbf16, #tpu.memory_space<vmem>>, %arg6: memref<1x128xf32, #tpu.memory_space<vmem>>, %arg7: memref<8x128xf32, #tpu.memory_space<vmem>>, %arg8: memref<8x128xf32, #tpu.memory_space<vmem>>, %arg9: memref<8x8x128xf32, #tpu.memory_space<vmem>>) attributes {dimension_semantics = [#tpu.dimension_semantics<parallel>, #tpu.dimension_semantics<arbitrary>], iteration_bounds = array<i64: 1, 1>, scalar_prefetch = 0 : i64, scratch_operands = 2 : i64, tpu.core_type = #tpu.core_type<tc>, window_params = [{transform_indices = @transform_0, window_bounds = array<i64: 8, 8, 128>}, {transform_indices = @transform_1, window_bounds = array<i64: 8, 128>}, {pipeline_mode = #tpu.pipeline_mode<synchronous>, transform_indices = @transform_2, window_bounds = array<i64: 128, 128>}, {pipeline_mode = #tpu.pipeline_mode<synchronous>, transform_indices = @transform_3, window_bounds = array<i64: 128, 128>}, {pipeline_mode = #tpu.pipeline_mode<synchronous>, transform_indices = @transform_4, window_bounds = array<i64: 1, 128>}, {transform_indices = @transform_5, window_bounds = array<i64: 8, 128>}]} {
    %c0_i32 = arith.constant 0 : i32
    %0 = arith.cmpi eq, %arg1, %c0_i32 : i32
    %1 = arith.extui %0 : i1 to i32
    %c0_i32_0 = arith.constant 0 : i32
    %2 = arith.cmpi ne, %1, %c0_i32_0 : i32
    scf.if %2 {
      %c0_45 = arith.constant 0 : index
      %c0_46 = arith.constant 0 : index
      %92 = vector.load %arg3[%c0_45, %c0_46] : memref<8x128xf32, #tpu.memory_space<vmem>>, vector<8x128xf32>
      %c0_47 = arith.constant 0 : index
      %c0_48 = arith.constant 0 : index
      %93 = vector.load %arg8[%c0_47, %c0_48] : memref<8x128xf32, #tpu.memory_space<vmem>>, vector<8x128xf32>
      tpu.vector_store %arg8[%c0_47, %c0_48], %92 {strides = array<i32>} : memref<8x128xf32, #tpu.memory_space<vmem>>, vector<8x128xf32>,
    } else {
    }
    %c0 = arith.constant 0 : index
    %c0_1 = arith.constant 0 : index
    %c0_2 = arith.constant 0 : index
    %3 = vector.load %arg2[%c0, %c0_1, %c0_2] : memref<8x8x128xbf16, #tpu.memory_space<vmem>>, vector<8x8x128xbf16>
    %4 = vector.shape_cast %3 : vector<8x8x128xbf16> to vector<64x128xbf16>
    %c0_3 = arith.constant 0 : index
    %c0_4 = arith.constant 0 : index
    %5 = vector.load %arg4[%c0_3, %c0_4] : memref<128x128xbf16, #tpu.memory_space<vmem>>, vector<128x128xbf16>
    %cst = arith.constant dense<0.000000e+00> : vector<64x128xf32>
    %6 = tpu.matmul %4, %5, %cst {dimension_numbers = #tpu.dot_dimension_numbers<[1], [0], [0], [1], [0, 0, 1, 1], [], []>} : vector<64x128xbf16>, vector<128x128xbf16>, vector<64x128xf32> -> vector<64x128xf32>
    %c0_5 = arith.constant 0 : index
    %c0_6 = arith.constant 0 : index
    %7 = vector.load %arg6[%c0_5, %c0_6] : memref<1x128xf32, #tpu.memory_space<vmem>>, vector<1x128xf32>
    %8 = vector.broadcast %7 : vector<1x128xf32> to vector<64x128xf32>
    %9 = arith.addf %6, %8 : vector<64x128xf32>
    %10 = vector.shape_cast %9 : vector<64x128xf32> to vector<8x8x128xf32>
    %c0_7 = arith.constant 0 : index
    %c0_8 = arith.constant 0 : index
    %c0_9 = arith.constant 0 : index
    %11 = vector.load %arg9[%c0_7, %c0_8, %c0_9] : memref<8x8x128xf32, #tpu.memory_space<vmem>>, vector<8x8x128xf32>
    tpu.vector_store %arg9[%c0_7, %c0_8, %c0_9], %10 {strides = array<i32>} : memref<8x8x128xf32, #tpu.memory_space<vmem>>, vector<8x8x128xf32>,
    %c0_10 = arith.constant 0 : index
    %c0_11 = arith.constant 0 : index
    %12 = vector.load %arg5[%c0_10, %c0_11] : memref<128x128xbf16, #tpu.memory_space<vmem>>, vector<128x128xbf16>
    %c8_i32 = arith.constant 8 : i32
    %13 = arith.muli %arg1, %c8_i32 : i32
    %c8_i32_12 = arith.constant 8 : i32
    %14 = arith.subi %c8_i32_12, %13 : i32
    %c0_13 = arith.constant 0 : index
    %c0_14 = arith.constant 0 : index
    %15 = vector.load %arg8[%c0_13, %c0_14] : memref<8x128xf32, #tpu.memory_space<vmem>>, vector<8x128xf32>
    %c0_i32_15 = arith.constant 0 : i32
    %16 = arith.index_cast %c0_i32_15 : i32 to index
    %c0_16 = arith.constant 0 : index
    %c0_17 = arith.constant 0 : index
    %17 = vector.load %arg9[%16, %c0_16, %c0_17] : memref<8x8x128xf32, #tpu.memory_space<vmem>>, vector<1x8x128xf32>
    %18 = vector.shape_cast %17 : vector<1x8x128xf32> to vector<8x128xf32>
    %19 = arith.truncf %15 : vector<8x128xf32> to vector<8x128xbf16>
    %cst_18 = arith.constant dense<0.000000e+00> : vector<8x128xf32>
    %20 = tpu.matmul %19, %12, %cst_18 {dimension_numbers = #tpu.dot_dimension_numbers<[1], [0], [0], [1], [0, 0, 1, 1], [], []>} : vector<8x128xbf16>, vector<128x128xbf16>, vector<8x128xf32> -> vector<8x128xf32>
    %21 = arith.addf %18, %20 : vector<8x128xf32>
    %22 = math.tanh %21 : vector<8x128xf32>
    %23 = arith.cmpi slt, %c0_i32_15, %14 : i32
    %24 = arith.select %23, %22, %15 : vector<8x128xf32>
    %c1_i32 = arith.constant 1 : i32
    %25 = arith.index_cast %c1_i32 : i32 to index
    %c0_19 = arith.constant 0 : index
    %c0_20 = arith.constant 0 : index
    %26 = vector.load %arg9[%25, %c0_19, %c0_20] : memref<8x8x128xf32, #tpu.memory_space<vmem>>, vector<1x8x128xf32>
    %27 = vector.shape_cast %26 : vector<1x8x128xf32> to vector<8x128xf32>
    %28 = arith.truncf %24 : vector<8x128xf32> to vector<8x128xbf16>
    %cst_21 = arith.constant dense<0.000000e+00> : vector<8x128xf32>
    %29 = tpu.matmul %28, %12, %cst_21 {dimension_numbers = #tpu.dot_dimension_numbers<[1], [0], [0], [1], [0, 0, 1, 1], [], []>} : vector<8x128xbf16>, vector<128x128xbf16>, vector<8x128xf32> -> vector<8x128xf32>
    %30 = arith.addf %27, %29 : vector<8x128xf32>
    %31 = math.tanh %30 : vector<8x128xf32>
    %32 = arith.cmpi slt, %c1_i32, %14 : i32
    %33 = arith.select %32, %31, %24 : vector<8x128xf32>
    %c2_i32 = arith.constant 2 : i32
    %34 = arith.index_cast %c2_i32 : i32 to index
    %c0_22 = arith.constant 0 : index
    %c0_23 = arith.constant 0 : index
    %35 = vector.load %arg9[%34, %c0_22, %c0_23] : memref<8x8x128xf32, #tpu.memory_space<vmem>>, vector<1x8x128xf32>
    %36 = vector.shape_cast %35 : vector<1x8x128xf32> to vector<8x128xf32>
    %37 = arith.truncf %33 : vector<8x128xf32> to vector<8x128xbf16>
    %cst_24 = arith.constant dense<0.000000e+00> : vector<8x128xf32>
    %38 = tpu.matmul %37, %12, %cst_24 {dimension_numbers = #tpu.dot_dimension_numbers<[1], [0], [0], [1], [0, 0, 1, 1], [], []>} : vector<8x128xbf16>, vector<128x128xbf16>, vector<8x128xf32> -> vector<8x128xf32>
    %39 = arith.addf %36, %38 : vector<8x128xf32>
    %40 = math.tanh %39 : vector<8x128xf32>
    %41 = arith.cmpi slt, %c2_i32, %14 : i32
    %42 = arith.select %41, %40, %33 : vector<8x128xf32>
    %c3_i32 = arith.constant 3 : i32
    %43 = arith.index_cast %c3_i32 : i32 to index
    %c0_25 = arith.constant 0 : index
    %c0_26 = arith.constant 0 : index
    %44 = vector.load %arg9[%43, %c0_25, %c0_26] : memref<8x8x128xf32, #tpu.memory_space<vmem>>, vector<1x8x128xf32>
    %45 = vector.shape_cast %44 : vector<1x8x128xf32> to vector<8x128xf32>
    %46 = arith.truncf %42 : vector<8x128xf32> to vector<8x128xbf16>
    %cst_27 = arith.constant dense<0.000000e+00> : vector<8x128xf32>
    %47 = tpu.matmul %46, %12, %cst_27 {dimension_numbers = #tpu.dot_dimension_numbers<[1], [0], [0], [1], [0, 0, 1, 1], [], []>} : vector<8x128xbf16>, vector<128x128xbf16>, vector<8x128xf32> -> vector<8x128xf32>
    %48 = arith.addf %45, %47 : vector<8x128xf32>
    %49 = math.tanh %48 : vector<8x128xf32>
    %50 = arith.cmpi slt, %c3_i32, %14 : i32
    %51 = arith.select %50, %49, %42 : vector<8x128xf32>
    %c4_i32 = arith.constant 4 : i32
    %52 = arith.index_cast %c4_i32 : i32 to index
    %c0_28 = arith.constant 0 : index
    %c0_29 = arith.constant 0 : index
    %53 = vector.load %arg9[%52, %c0_28, %c0_29] : memref<8x8x128xf32, #tpu.memory_space<vmem>>, vector<1x8x128xf32>
    %54 = vector.shape_cast %53 : vector<1x8x128xf32> to vector<8x128xf32>
    %55 = arith.truncf %51 : vector<8x128xf32> to vector<8x128xbf16>
    %cst_30 = arith.constant dense<0.000000e+00> : vector<8x128xf32>
    %56 = tpu.matmul %55, %12, %cst_30 {dimension_numbers = #tpu.dot_dimension_numbers<[1], [0], [0], [1], [0, 0, 1, 1], [], []>} : vector<8x128xbf16>, vector<128x128xbf16>, vector<8x128xf32> -> vector<8x128xf32>
    %57 = arith.addf %54, %56 : vector<8x128xf32>
    %58 = math.tanh %57 : vector<8x128xf32>
    %59 = arith.cmpi slt, %c4_i32, %14 : i32
    %60 = arith.select %59, %58, %51 : vector<8x128xf32>
    %c5_i32 = arith.constant 5 : i32
    %61 = arith.index_cast %c5_i32 : i32 to index
    %c0_31 = arith.constant 0 : index
    %c0_32 = arith.constant 0 : index
    %62 = vector.load %arg9[%61, %c0_31, %c0_32] : memref<8x8x128xf32, #tpu.memory_space<vmem>>, vector<1x8x128xf32>
    %63 = vector.shape_cast %62 : vector<1x8x128xf32> to vector<8x128xf32>
    %64 = arith.truncf %60 : vector<8x128xf32> to vector<8x128xbf16>
    %cst_33 = arith.constant dense<0.000000e+00> : vector<8x128xf32>
    %65 = tpu.matmul %64, %12, %cst_33 {dimension_numbers = #tpu.dot_dimension_numbers<[1], [0], [0], [1], [0, 0, 1, 1], [], []>} : vector<8x128xbf16>, vector<128x128xbf16>, vector<8x128xf32> -> vector<8x128xf32>
    %66 = arith.addf %63, %65 : vector<8x128xf32>
    %67 = math.tanh %66 : vector<8x128xf32>
    %68 = arith.cmpi slt, %c5_i32, %14 : i32
    %69 = arith.select %68, %67, %60 : vector<8x128xf32>
    %c6_i32 = arith.constant 6 : i32
    %70 = arith.index_cast %c6_i32 : i32 to index
    %c0_34 = arith.constant 0 : index
    %c0_35 = arith.constant 0 : index
    %71 = vector.load %arg9[%70, %c0_34, %c0_35] : memref<8x8x128xf32, #tpu.memory_space<vmem>>, vector<1x8x128xf32>
    %72 = vector.shape_cast %71 : vector<1x8x128xf32> to vector<8x128xf32>
    %73 = arith.truncf %69 : vector<8x128xf32> to vector<8x128xbf16>
    %cst_36 = arith.constant dense<0.000000e+00> : vector<8x128xf32>
    %74 = tpu.matmul %73, %12, %cst_36 {dimension_numbers = #tpu.dot_dimension_numbers<[1], [0], [0], [1], [0, 0, 1, 1], [], []>} : vector<8x128xbf16>, vector<128x128xbf16>, vector<8x128xf32> -> vector<8x128xf32>
    %75 = arith.addf %72, %74 : vector<8x128xf32>
    %76 = math.tanh %75 : vector<8x128xf32>
    %77 = arith.cmpi slt, %c6_i32, %14 : i32
    %78 = arith.select %77, %76, %69 : vector<8x128xf32>
    %c7_i32 = arith.constant 7 : i32
    %79 = arith.index_cast %c7_i32 : i32 to index
    %c0_37 = arith.constant 0 : index
    %c0_38 = arith.constant 0 : index
    %80 = vector.load %arg9[%79, %c0_37, %c0_38] : memref<8x8x128xf32, #tpu.memory_space<vmem>>, vector<1x8x128xf32>
    %81 = vector.shape_cast %80 : vector<1x8x128xf32> to vector<8x128xf32>
    %82 = arith.truncf %78 : vector<8x128xf32> to vector<8x128xbf16>
    %cst_39 = arith.constant dense<0.000000e+00> : vector<8x128xf32>
    %83 = tpu.matmul %82, %12, %cst_39 {dimension_numbers = #tpu.dot_dimension_numbers<[1], [0], [0], [1], [0, 0, 1, 1], [], []>} : vector<8x128xbf16>, vector<128x128xbf16>, vector<8x128xf32> -> vector<8x128xf32>
    %84 = arith.addf %81, %83 : vector<8x128xf32>
    %85 = math.tanh %84 : vector<8x128xf32>
    %86 = arith.cmpi slt, %c7_i32, %14 : i32
    %87 = arith.select %86, %85, %78 : vector<8x128xf32>
    %c8_i32_40 = arith.constant 8 : i32
    %c0_41 = arith.constant 0 : index
    %c0_42 = arith.constant 0 : index
    %88 = vector.load %arg8[%c0_41, %c0_42] : memref<8x128xf32, #tpu.memory_space<vmem>>, vector<8x128xf32>
    tpu.vector_store %arg8[%c0_41, %c0_42], %87 {strides = array<i32>} : memref<8x128xf32, #tpu.memory_space<vmem>>, vector<8x128xf32>,
    %c0_i32_43 = arith.constant 0 : i32
    %89 = arith.cmpi eq, %arg1, %c0_i32_43 : i32
    %90 = arith.extui %89 : i1 to i32
    %c0_i32_44 = arith.constant 0 : i32
    %91 = arith.cmpi ne, %90, %c0_i32_44 : i32
    scf.if %91 {
      %c0_45 = arith.constant 0 : index
      %c0_46 = arith.constant 0 : index
      %92 = vector.load %arg7[%c0_45, %c0_46] : memref<8x128xf32, #tpu.memory_space<vmem>>, vector<8x128xf32>
      tpu.vector_store %arg7[%c0_45, %c0_46], %87 {strides = array<i32>} : memref<8x128xf32, #tpu.memory_space<vmem>>, vector<8x128xf32>,
    } else {
    }
    return
  }
  func.func @transform_0(%arg0: i32, %arg1: i32) -> (i32, i32, i32) {
    %c0_i32 = arith.constant 0 : i32
    %c0_i32_0 = arith.constant 0 : i32
    return %arg1, %arg0, %c0_i32 : i32, i32, i32
  }
  func.func @transform_1(%arg0: i32, %arg1: i32) -> (i32, i32) {
    %c0_i32 = arith.constant 0 : i32
    %c0_i32_0 = arith.constant 0 : i32
    return %arg0, %c0_i32 : i32, i32
  }
  func.func @transform_2(%arg0: i32, %arg1: i32) -> (i32, i32) {
    %c0_i32 = arith.constant 0 : i32
    %c0_i32_0 = arith.constant 0 : i32
    %c0_i32_1 = arith.constant 0 : i32
    return %c0_i32, %c0_i32_0 : i32, i32
  }
  func.func @transform_3(%arg0: i32, %arg1: i32) -> (i32, i32) {
    %c0_i32 = arith.constant 0 : i32
    %c0_i32_0 = arith.constant 0 : i32
    %c0_i32_1 = arith.constant 0 : i32
    return %c0_i32, %c0_i32_0 : i32, i32
  }
  func.func @transform_4(%arg0: i32, %arg1: i32) -> (i32, i32) {
    %c0_i32 = arith.constant 0 : i32
    %c0_i32_0 = arith.constant 0 : i32
    %c0_i32_1 = arith.constant 0 : i32
    return %c0_i32, %c0_i32_0 : i32, i32
  }
  func.func @transform_5(%arg0: i32, %arg1: i32) -> (i32, i32) {
    %c0_i32 = arith.constant 0 : i32
    %c0_i32_0 = arith.constant 0 : i32
    return %arg0, %c0_i32 : i32, i32
  }
}

module attributes {stable_mosaic.version = 11 : i64} {
  func.func @kernel(%arg0: i32, %arg1: i32, %arg2: memref<8x8x128xbf16, #tpu.memory_space<vmem>>, %arg3: memref<8x128xf32, #tpu.memory_space<vmem>>, %arg4: memref<128x128xbf16, #tpu.memory_space<vmem>>, %arg5: memref<128x128xbf16, #tpu.memory_space<vmem>>, %arg6: memref<1x128xf32, #tpu.memory_space<vmem>>, %arg7: memref<8x128xf32, #tpu.memory_space<vmem>>, %arg8: memref<8x128xf32, #tpu.memory_space<vmem>>, %arg9: memref<8x8x128xf32, #tpu.memory_space<vmem>>) attributes {dimension_semantics = [#tpu.dimension_semantics<parallel>, #tpu.dimension_semantics<arbitrary>], iteration_bounds = array<i64: 1, 1>, scalar_prefetch = 0 : i64, scratch_operands = 2 : i64, tpu.core_type = #tpu.core_type<tc>, window_params = [{transform_indices = @transform_0, window_bounds = array<i64: 8, 8, 128>}, {transform_indices = @transform_1, window_bounds = array<i64: 8, 128>}, {pipeline_mode = #tpu.pipeline_mode<synchronous>, transform_indices = @transform_2, window_bounds = array<i64: 128, 128>}, {pipeline_mode = #tpu.pipeline_mode<synchronous>, transform_indices = @transform_3, window_bounds = array<i64: 128, 128>}, {pipeline_mode = #tpu.pipeline_mode<synchronous>, transform_indices = @transform_4, window_bounds = array<i64: 1, 128>}, {transform_indices = @transform_5, window_bounds = array<i64: 8, 128>}]} {
    %c0_i32 = arith.constant 0 : i32
    %0 = arith.cmpi eq, %arg1, %c0_i32 : i32
    %1 = arith.extui %0 : i1 to i32
    %c0_i32_0 = arith.constant 0 : i32
    %2 = arith.cmpi ne, %1, %c0_i32_0 : i32
    scf.if %2 {
      %c0_45 = arith.constant 0 : index
      %c0_46 = arith.constant 0 : index
      %92 = vector.load %arg3[%c0_45, %c0_46] : memref<8x128xf32, #tpu.memory_space<vmem>>, vector<8x128xf32>
      %c0_47 = arith.constant 0 : index
      %c0_48 = arith.constant 0 : index
      %93 = vector.load %arg8[%c0_47, %c0_48] : memref<8x128xf32, #tpu.memory_space<vmem>>, vector<8x128xf32>
      tpu.vector_store %arg8[%c0_47, %c0_48], %92 {strides = array<i32>} : memref<8x128xf32, #tpu.memory_space<vmem>>, vector<8x128xf32>,
    } else {
    }
    %c0 = arith.constant 0 : index
    %c0_1 = arith.constant 0 : index
    %c0_2 = arith.constant 0 : index
    %3 = vector.load %arg2[%c0, %c0_1, %c0_2] : memref<8x8x128xbf16, #tpu.memory_space<vmem>>, vector<8x8x128xbf16>
    %4 = vector.shape_cast %3 : vector<8x8x128xbf16> to vector<64x128xbf16>
    %c0_3 = arith.constant 0 : index
    %c0_4 = arith.constant 0 : index
    %5 = vector.load %arg4[%c0_3, %c0_4] : memref<128x128xbf16, #tpu.memory_space<vmem>>, vector<128x128xbf16>
    %cst = arith.constant dense<0.000000e+00> : vector<64x128xf32>
    %6 = tpu.matmul %4, %5, %cst {dimension_numbers = #tpu.dot_dimension_numbers<[1], [0], [0], [1], [0, 0, 1, 1], [], []>} : vector<64x128xbf16>, vector<128x128xbf16>, vector<64x128xf32> -> vector<64x128xf32>
    %c0_5 = arith.constant 0 : index
    %c0_6 = arith.constant 0 : index
    %7 = vector.load %arg6[%c0_5, %c0_6] : memref<1x128xf32, #tpu.memory_space<vmem>>, vector<1x128xf32>
    %8 = vector.broadcast %7 : vector<1x128xf32> to vector<64x128xf32>
    %9 = arith.addf %6, %8 : vector<64x128xf32>
    %10 = vector.shape_cast %9 : vector<64x128xf32> to vector<8x8x128xf32>
    %c0_7 = arith.constant 0 : index
    %c0_8 = arith.constant 0 : index
    %c0_9 = arith.constant 0 : index
    %11 = vector.load %arg9[%c0_7, %c0_8, %c0_9] : memref<8x8x128xf32, #tpu.memory_space<vmem>>, vector<8x8x128xf32>
    tpu.vector_store %arg9[%c0_7, %c0_8, %c0_9], %10 {strides = array<i32>} : memref<8x8x128xf32, #tpu.memory_space<vmem>>, vector<8x8x128xf32>,
    %c0_10 = arith.constant 0 : index
    %c0_11 = arith.constant 0 : index
    %12 = vector.load %arg5[%c0_10, %c0_11] : memref<128x128xbf16, #tpu.memory_space<vmem>>, vector<128x128xbf16>
    %c8_i32 = arith.constant 8 : i32
    %13 = arith.muli %arg1, %c8_i32 : i32
    %c8_i32_12 = arith.constant 8 : i32
    %14 = arith.subi %c8_i32_12, %13 : i32
    %c0_13 = arith.constant 0 : index
    %c0_14 = arith.constant 0 : index
    %15 = vector.load %arg8[%c0_13, %c0_14] : memref<8x128xf32, #tpu.memory_space<vmem>>, vector<8x128xf32>
    %c0_i32_15 = arith.constant 0 : i32
    %16 = arith.index_cast %c0_i32_15 : i32 to index
    %c0_16 = arith.constant 0 : index
    %c0_17 = arith.constant 0 : index
    %17 = vector.load %arg9[%16, %c0_16, %c0_17] : memref<8x8x128xf32, #tpu.memory_space<vmem>>, vector<1x8x128xf32>
    %18 = vector.shape_cast %17 : vector<1x8x128xf32> to vector<8x128xf32>
    %19 = arith.truncf %15 : vector<8x128xf32> to vector<8x128xbf16>
    %cst_18 = arith.constant dense<0.000000e+00> : vector<8x128xf32>
    %20 = tpu.matmul %19, %12, %cst_18 {dimension_numbers = #tpu.dot_dimension_numbers<[1], [0], [0], [1], [0, 0, 1, 1], [], []>} : vector<8x128xbf16>, vector<128x128xbf16>, vector<8x128xf32> -> vector<8x128xf32>
    %21 = arith.addf %18, %20 : vector<8x128xf32>
    %22 = math.tanh %21 : vector<8x128xf32>
    %23 = arith.cmpi slt, %c0_i32_15, %14 : i32
    %24 = arith.select %23, %22, %15 : vector<8x128xf32>
    %c1_i32 = arith.constant 1 : i32
    %25 = arith.index_cast %c1_i32 : i32 to index
    %c0_19 = arith.constant 0 : index
    %c0_20 = arith.constant 0 : index
    %26 = vector.load %arg9[%25, %c0_19, %c0_20] : memref<8x8x128xf32, #tpu.memory_space<vmem>>, vector<1x8x128xf32>
    %27 = vector.shape_cast %26 : vector<1x8x128xf32> to vector<8x128xf32>
    %28 = arith.truncf %24 : vector<8x128xf32> to vector<8x128xbf16>
    %cst_21 = arith.constant dense<0.000000e+00> : vector<8x128xf32>
    %29 = tpu.matmul %28, %12, %cst_21 {dimension_numbers = #tpu.dot_dimension_numbers<[1], [0], [0], [1], [0, 0, 1, 1], [], []>} : vector<8x128xbf16>, vector<128x128xbf16>, vector<8x128xf32> -> vector<8x128xf32>
    %30 = arith.addf %27, %29 : vector<8x128xf32>
    %31 = math.tanh %30 : vector<8x128xf32>
    %32 = arith.cmpi slt, %c1_i32, %14 : i32
    %33 = arith.select %32, %31, %24 : vector<8x128xf32>
    %c2_i32 = arith.constant 2 : i32
    %34 = arith.index_cast %c2_i32 : i32 to index
    %c0_22 = arith.constant 0 : index
    %c0_23 = arith.constant 0 : index
    %35 = vector.load %arg9[%34, %c0_22, %c0_23] : memref<8x8x128xf32, #tpu.memory_space<vmem>>, vector<1x8x128xf32>
    %36 = vector.shape_cast %35 : vector<1x8x128xf32> to vector<8x128xf32>
    %37 = arith.truncf %33 : vector<8x128xf32> to vector<8x128xbf16>
    %cst_24 = arith.constant dense<0.000000e+00> : vector<8x128xf32>
    %38 = tpu.matmul %37, %12, %cst_24 {dimension_numbers = #tpu.dot_dimension_numbers<[1], [0], [0], [1], [0, 0, 1, 1], [], []>} : vector<8x128xbf16>, vector<128x128xbf16>, vector<8x128xf32> -> vector<8x128xf32>
    %39 = arith.addf %36, %38 : vector<8x128xf32>
    %40 = math.tanh %39 : vector<8x128xf32>
    %41 = arith.cmpi slt, %c2_i32, %14 : i32
    %42 = arith.select %41, %40, %33 : vector<8x128xf32>
    %c3_i32 = arith.constant 3 : i32
    %43 = arith.index_cast %c3_i32 : i32 to index
    %c0_25 = arith.constant 0 : index
    %c0_26 = arith.constant 0 : index
    %44 = vector.load %arg9[%43, %c0_25, %c0_26] : memref<8x8x128xf32, #tpu.memory_space<vmem>>, vector<1x8x128xf32>
    %45 = vector.shape_cast %44 : vector<1x8x128xf32> to vector<8x128xf32>
    %46 = arith.truncf %42 : vector<8x128xf32> to vector<8x128xbf16>
    %cst_27 = arith.constant dense<0.000000e+00> : vector<8x128xf32>
    %47 = tpu.matmul %46, %12, %cst_27 {dimension_numbers = #tpu.dot_dimension_numbers<[1], [0], [0], [1], [0, 0, 1, 1], [], []>} : vector<8x128xbf16>, vector<128x128xbf16>, vector<8x128xf32> -> vector<8x128xf32>
    %48 = arith.addf %45, %47 : vector<8x128xf32>
    %49 = math.tanh %48 : vector<8x128xf32>
    %50 = arith.cmpi slt, %c3_i32, %14 : i32
    %51 = arith.select %50, %49, %42 : vector<8x128xf32>
    %c4_i32 = arith.constant 4 : i32
    %52 = arith.index_cast %c4_i32 : i32 to index
    %c0_28 = arith.constant 0 : index
    %c0_29 = arith.constant 0 : index
    %53 = vector.load %arg9[%52, %c0_28, %c0_29] : memref<8x8x128xf32, #tpu.memory_space<vmem>>, vector<1x8x128xf32>
    %54 = vector.shape_cast %53 : vector<1x8x128xf32> to vector<8x128xf32>
    %55 = arith.truncf %51 : vector<8x128xf32> to vector<8x128xbf16>
    %cst_30 = arith.constant dense<0.000000e+00> : vector<8x128xf32>
    %56 = tpu.matmul %55, %12, %cst_30 {dimension_numbers = #tpu.dot_dimension_numbers<[1], [0], [0], [1], [0, 0, 1, 1], [], []>} : vector<8x128xbf16>, vector<128x128xbf16>, vector<8x128xf32> -> vector<8x128xf32>
    %57 = arith.addf %54, %56 : vector<8x128xf32>
    %58 = math.tanh %57 : vector<8x128xf32>
    %59 = arith.cmpi slt, %c4_i32, %14 : i32
    %60 = arith.select %59, %58, %51 : vector<8x128xf32>
    %c5_i32 = arith.constant 5 : i32
    %61 = arith.index_cast %c5_i32 : i32 to index
    %c0_31 = arith.constant 0 : index
    %c0_32 = arith.constant 0 : index
    %62 = vector.load %arg9[%61, %c0_31, %c0_32] : memref<8x8x128xf32, #tpu.memory_space<vmem>>, vector<1x8x128xf32>
    %63 = vector.shape_cast %62 : vector<1x8x128xf32> to vector<8x128xf32>
    %64 = arith.truncf %60 : vector<8x128xf32> to vector<8x128xbf16>
    %cst_33 = arith.constant dense<0.000000e+00> : vector<8x128xf32>
    %65 = tpu.matmul %64, %12, %cst_33 {dimension_numbers = #tpu.dot_dimension_numbers<[1], [0], [0], [1], [0, 0, 1, 1], [], []>} : vector<8x128xbf16>, vector<128x128xbf16>, vector<8x128xf32> -> vector<8x128xf32>
    %66 = arith.addf %63, %65 : vector<8x128xf32>
    %67 = math.tanh %66 : vector<8x128xf32>
    %68 = arith.cmpi slt, %c5_i32, %14 : i32
    %69 = arith.select %68, %67, %60 : vector<8x128xf32>
    %c6_i32 = arith.constant 6 : i32
    %70 = arith.index_cast %c6_i32 : i32 to index
    %c0_34 = arith.constant 0 : index
    %c0_35 = arith.constant 0 : index
    %71 = vector.load %arg9[%70, %c0_34, %c0_35] : memref<8x8x128xf32, #tpu.memory_space<vmem>>, vector<1x8x128xf32>
    %72 = vector.shape_cast %71 : vector<1x8x128xf32> to vector<8x128xf32>
    %73 = arith.truncf %69 : vector<8x128xf32> to vector<8x128xbf16>
    %cst_36 = arith.constant dense<0.000000e+00> : vector<8x128xf32>
    %74 = tpu.matmul %73, %12, %cst_36 {dimension_numbers = #tpu.dot_dimension_numbers<[1], [0], [0], [1], [0, 0, 1, 1], [], []>} : vector<8x128xbf16>, vector<128x128xbf16>, vector<8x128xf32> -> vector<8x128xf32>
    %75 = arith.addf %72, %74 : vector<8x128xf32>
    %76 = math.tanh %75 : vector<8x128xf32>
    %77 = arith.cmpi slt, %c6_i32, %14 : i32
    %78 = arith.select %77, %76, %69 : vector<8x128xf32>
    %c7_i32 = arith.constant 7 : i32
    %79 = arith.index_cast %c7_i32 : i32 to index
    %c0_37 = arith.constant 0 : index
    %c0_38 = arith.constant 0 : index
    %80 = vector.load %arg9[%79, %c0_37, %c0_38] : memref<8x8x128xf32, #tpu.memory_space<vmem>>, vector<1x8x128xf32>
    %81 = vector.shape_cast %80 : vector<1x8x128xf32> to vector<8x128xf32>
    %82 = arith.truncf %78 : vector<8x128xf32> to vector<8x128xbf16>
    %cst_39 = arith.constant dense<0.000000e+00> : vector<8x128xf32>
    %83 = tpu.matmul %82, %12, %cst_39 {dimension_numbers = #tpu.dot_dimension_numbers<[1], [0], [0], [1], [0, 0, 1, 1], [], []>} : vector<8x128xbf16>, vector<128x128xbf16>, vector<8x128xf32> -> vector<8x128xf32>
    %84 = arith.addf %81, %83 : vector<8x128xf32>
    %85 = math.tanh %84 : vector<8x128xf32>
    %86 = arith.cmpi slt, %c7_i32, %14 : i32
    %87 = arith.select %86, %85, %78 : vector<8x128xf32>
    %c8_i32_40 = arith.constant 8 : i32
    %c0_41 = arith.constant 0 : index
    %c0_42 = arith.constant 0 : index
    %88 = vector.load %arg8[%c0_41, %c0_42] : memref<8x128xf32, #tpu.memory_space<vmem>>, vector<8x128xf32>
    tpu.vector_store %arg8[%c0_41, %c0_42], %87 {strides = array<i32>} : memref<8x128xf32, #tpu.memory_space<vmem>>, vector<8x128xf32>,
    %c0_i32_43 = arith.constant 0 : i32
    %89 = arith.cmpi eq, %arg1, %c0_i32_43 : i32
    %90 = arith.extui %89 : i1 to i32
    %c0_i32_44 = arith.constant 0 : i32
    %91 = arith.cmpi ne, %90, %c0_i32_44 : i32
    scf.if %91 {
      %c0_45 = arith.constant 0 : index
      %c0_46 = arith.constant 0 : index
      %92 = vector.load %arg7[%c0_45, %c0_46] : memref<8x128xf32, #tpu.memory_space<vmem>>, vector<8x128xf32>
      tpu.vector_store %arg7[%c0_45, %c0_46], %87 {strides = array<i32>} : memref<8x128xf32, #tpu.memory_space<vmem>>, vector<8x128xf32>,
    } else {
    }
    return
  }
  func.func @transform_0(%arg0: i32, %arg1: i32) -> (i32, i32, i32) {
    %c0_i32 = arith.constant 0 : i32
    %c0_i32_0 = arith.constant 0 : i32
    return %arg1, %arg0, %c0_i32 : i32, i32, i32
  }
  func.func @transform_1(%arg0: i32, %arg1: i32) -> (i32, i32) {
    %c0_i32 = arith.constant 0 : i32
    %c0_i32_0 = arith.constant 0 : i32
    return %arg0, %c0_i32 : i32, i32
  }
  func.func @transform_2(%arg0: i32, %arg1: i32) -> (i32, i32) {
    %c0_i32 = arith.constant 0 : i32
    %c0_i32_0 = arith.constant 0 : i32
    %c0_i32_1 = arith.constant 0 : i32
    return %c0_i32, %c0_i32_0 : i32, i32
  }
  func.func @transform_3(%arg0: i32, %arg1: i32) -> (i32, i32) {
    %c0_i32 = arith.constant 0 : i32
    %c0_i32_0 = arith.constant 0 : i32
    %c0_i32_1 = arith.constant 0 : i32
    return %c0_i32, %c0_i32_0 : i32, i32
  }
  func.func @transform_4(%arg0: i32, %arg1: i32) -> (i32, i32) {
    %c0_i32 = arith.constant 0 : i32
    %c0_i32_0 = arith.constant 0 : i32
    %c0_i32_1 = arith.constant 0 : i32
    return %c0_i32, %c0_i32_0 : i32, i32
  }
  func.func @transform_5(%arg0: i32, %arg1: i32) -> (i32, i32) {
    %c0_i32 = arith.constant 0 : i32
    %c0_i32_0 = arith.constant 0 : i32
    return %arg0, %c0_i32 : i32, i32
  }
}

</mosaic_0001>

<llo_original>
// kernel: tpu_custom_call.1
$region0: #{tpu_custom_call.1}
  #allocation0 [shape = 'u32[]', space=smem, size = 0x4, offset = 0x4, fixed_abs, tag = 'smem constant byte address 0x4 - core index']
  #allocation1 [shape = 'u32[144,128]{1,0:T(1,128)}', space=vmem, size = 0x12000, scoped, tag = 'internal scratch']
  #allocation2 [shape = 'f32[8,128]{1,0:T(8,128)}', space=vmem, size = 0x1000, scoped, tag = 'scratch operand']
  #allocation3 [shape = 'f32[8,8,128]{2,1,0:T(8,128)}', space=vmem, size = 0x8000, scoped, tag = 'scratch operand']
  %s0 = inlined_call_operand.hbm [shape: bf16[8,8,128], index: 0, kind: input, shape index: {}]
  %s1 = inlined_call_operand.hbm [shape: f32[8,128], index: 1, kind: input, shape index: {}]
  %s2 = inlined_call_operand.hbm [shape: bf16[128,128], index: 2, kind: input, shape index: {}]
  %s3 = inlined_call_operand.hbm [shape: bf16[128,128], index: 3, kind: input, shape index: {}]
  %s4 = inlined_call_operand.vmem [shape: f32[1,128], index: 4, kind: input, shape index: {}]
  %s5 = inlined_call_operand.hbm [shape: f32[8,128], index: 5, kind: output, shape index: {}]
  %s6 = sld [smem:[#allocation0]]
  $region54: #{tpu_custom_call.1} parent=0
    _
  %s8 = ssub.s32 1, %s6
  %s9 = scalar_select 0, %s8, %s6
  $region1: #{tpu_custom_call.1} parent=0
    #allocation4 [shape = 'u8[16384]{0}', space=vmem, size = 0x4000, scoped, tag = 'input window, operand 0, single buffered']
    #allocation5 [shape = 's32[1]{0}', space=sflag, size = 0x4, scoped, tag = 'scoped memory for tpu_custom_call.1']
    #allocation6 [shape = 's32[1]{0}', space=sflag, size = 0x4, scoped, tag = 'scoped memory for tpu_custom_call.1']
    #allocation7 [shape = 'u8[4096]{0}', space=vmem, size = 0x1000, scoped, tag = 'input window, operand 1, single buffered']
    #allocation8 [shape = 's32[1]{0}', space=sflag, size = 0x4, scoped, tag = 'scoped memory for tpu_custom_call.1']
    #allocation9 [shape = 'u8[32768]{0}', space=vmem, size = 0x8000, scoped, tag = 'input window, operand 2, single buffered']
    #allocation10 [shape = 'u8[32768]{0}', space=vmem, size = 0x8000, scoped, tag = 'input window, operand 3, single buffered']
    #allocation11 [shape = 's32[1]{0}', space=sflag, size = 0x4, scoped, tag = 'scoped memory for tpu_custom_call.1']
    #allocation12 [shape = 'u8[4096]{0}', space=vmem, size = 0x1000, scoped, tag = 'output window, operand 0, single buffered']
    %10 = vsyncpa [#allocation5], 0
    %11 = vsyncpa [#allocation8], 0
    %12 = vsyncpa [#allocation11], 0
    %13 = vsyncpa [#allocation6], 0
    // Predicated region
    $region2: #{tpu_custom_call.1} parent=1 // pred_check
      _
    $region3: #{tpu_custom_call.1} parent=1 // pred_check_branch
      %15 = sbr.rel (0) target = $region5
    $region4: #{tpu_custom_call.1} parent=1 // pred_region
      %s17 = ssub.s32 512, 512
      %18 = vsyncadd [#allocation5], %s17
      %s19 = sshll.u32 [#allocation4], 4
      %s20 = int_to_ptr.vmem [resolvable:$true] %s19
      %25 = dma.hbm_to_vmem [thread:$0]  %s0, 512, %s20, [#allocation5], 64, 64, 4
    $region5: #{tpu_custom_call.1} parent=1 // pred_fallthru
      _
    // Predicated region
    $region6: #{tpu_custom_call.1} parent=1 // pred_check
      _
    $region7: #{tpu_custom_call.1} parent=1 // pred_check_branch
      %27 = sbr.rel (0) target = $region9
    $region8: #{tpu_custom_call.1} parent=1 // pred_region
      %s29 = ssub.s32 128, 128
      %30 = vsyncadd [#allocation8], %s29
      %s32 = sshll.u32 [#allocation7], 4
      %s33 = int_to_ptr.vmem [resolvable:$true] %s32
      %35 = dma.hbm_to_vmem [thread:$0]  %s1, 128, %s33, [#allocation8]
    $region9: #{tpu_custom_call.1} parent=1 // pred_fallthru
      _
    // Predicated region
    $region10: #{tpu_custom_call.1} parent=1 // pred_check
      _
    $region11: #{tpu_custom_call.1} parent=1 // pred_check_branch
      %37 = sbr.rel (0) target = $region13
    $region12: #{tpu_custom_call.1} parent=1 // pred_region
      %s39 = ssub.s32 1024, 1024
      %40 = vsyncadd [#allocation8], %s39
      %s41 = sshll.u32 [#allocation9], 4
      %s42 = int_to_ptr.vmem [resolvable:$true] %s41
      %47 = dma.hbm_to_vmem [thread:$0]  %s2, 1024, %s42, [#allocation8], 64, 64, 4
    $region13: #{tpu_custom_call.1} parent=1 // pred_fallthru
      _
    // Predicated region
    $region14: #{tpu_custom_call.1} parent=1 // pred_check
      _
    $region15: #{tpu_custom_call.1} parent=1 // pred_check_branch
      %49 = sbr.rel (0) target = $region17
    $region16: #{tpu_custom_call.1} parent=1 // pred_region
      %s51 = ssub.s32 1024, 1024
      %52 = vsyncadd [#allocation11], %s51
      %s53 = sshll.u32 [#allocation10], 4
      %s54 = int_to_ptr.vmem [resolvable:$true] %s53
      %59 = dma.hbm_to_vmem [thread:$0]  %s3, 1024, %s54, [#allocation11], 64, 64, 4
    $region17: #{tpu_custom_call.1} parent=1 // pred_fallthru
      _
    // Predicated region
    $region18: #{tpu_custom_call.1} parent=1 // pred_check
      _
    $region19: #{tpu_custom_call.1} parent=1 // pred_check_branch
      %61 = sbr.rel (0) target = $region21
    $region20: #{tpu_custom_call.1} parent=1 // pred_region
      _
    $region21: #{tpu_custom_call.1} parent=1 // pred_fallthru
      _
    // Predicated region
    $region22: #{tpu_custom_call.1} parent=1 // pred_check
      _
    $region23: #{tpu_custom_call.1} parent=1 // pred_check_branch
      %63 = sbr.rel (0) target = $region25
    $region24: #{tpu_custom_call.1} parent=1 // pred_region
      %64 = dma.done [#allocation5], 512
    $region25: #{tpu_custom_call.1} parent=1 // pred_fallthru
      _
    // Predicated region
    $region26: #{tpu_custom_call.1} parent=1 // pred_check
      _
    $region27: #{tpu_custom_call.1} parent=1 // pred_check_branch
      %66 = sbr.rel (0) target = $region29
    $region28: #{tpu_custom_call.1} parent=1 // pred_region
      %67 = dma.done [#allocation8], 128
    $region29: #{tpu_custom_call.1} parent=1 // pred_fallthru
      _
    // Predicated region
    $region30: #{tpu_custom_call.1} parent=1 // pred_check
      _
    $region31: #{tpu_custom_call.1} parent=1 // pred_check_branch
      %69 = sbr.rel (0) target = $region33
    $region32: #{tpu_custom_call.1} parent=1 // pred_region
      %70 = dma.done [#allocation8], 1024
    $region33: #{tpu_custom_call.1} parent=1 // pred_fallthru
      _
    // Predicated region
    $region34: #{tpu_custom_call.1} parent=1 // pred_check
      _
    $region35: #{tpu_custom_call.1} parent=1 // pred_check_branch
      %72 = sbr.rel (0) target = $region37
    $region36: #{tpu_custom_call.1} parent=1 // pred_region
      %73 = dma.done [#allocation11], 1024
    $region37: #{tpu_custom_call.1} parent=1 // pred_fallthru
      _
    %p75 = scmp.eq.s32.totalorder 0, 0
    // Predicated region
    $region38: #{tpu_custom_call.1} parent=1 // pred_check
      %p76 = pneg %p75
    $region39: #{tpu_custom_call.1} parent=1 // pred_check_branch
      %78 = sbr.rel (%p76) target = $region41
    $region40: #{tpu_custom_call.1} parent=1 // pred_region
      %v79 = vld [vmem:[#allocation7] sm:$0xff]
      %80 = vst [vmem:[#allocation2] sm:$0xff] %v79
    $region41: #{tpu_custom_call.1} parent=1 // pred_fallthru
      _
    %v81 = vld [vmem:[#allocation4] sm:$0xf]
    %v82 = vld [vmem:[#allocation4 + $0x4] sm:$0xf]
    %v83 = vld [vmem:[#allocation4 + $0x8] sm:$0xf]
    %v84 = vld [vmem:[#allocation4 + $0xc] sm:$0xf]
    %v85 = vld [vmem:[#allocation4 + $0x10] sm:$0xf]
    %v86 = vld [vmem:[#allocation4 + $0x14] sm:$0xf]
    %v87 = vld [vmem:[#allocation4 + $0x18] sm:$0xf]
    %v88 = vld [vmem:[#allocation4 + $0x1c] sm:$0xf]
    %v89 = vld [vmem:[#allocation9] sm:$0xf]
    %v90 = vld [vmem:[#allocation9 + $0x4] sm:$0xf]
    %v91 = vld [vmem:[#allocation9 + $0x8] sm:$0xf]
    %v92 = vld [vmem:[#allocation9 + $0xc] sm:$0xf]
    %v93 = vld [vmem:[#allocation9 + $0x10] sm:$0xf]
    %v94 = vld [vmem:[#allocation9 + $0x14] sm:$0xf]
    %v95 = vld [vmem:[#allocation9 + $0x18] sm:$0xf]
    %v96 = vld [vmem:[#allocation9 + $0x1c] sm:$0xf]
    %v97 = vld [vmem:[#allocation9 + $0x20] sm:$0xf]
    %v98 = vld [vmem:[#allocation9 + $0x24] sm:$0xf]
    %v99 = vld [vmem:[#allocation9 + $0x28] sm:$0xf]
    %v100 = vld [vmem:[#allocation9 + $0x2c] sm:$0xf]
    %v101 = vld [vmem:[#allocation9 + $0x30] sm:$0xf]
    %v102 = vld [vmem:[#allocation9 + $0x34] sm:$0xf]
    %v103 = vld [vmem:[#allocation9 + $0x38] sm:$0xf]
    %v104 = vld [vmem:[#allocation9 + $0x3c] sm:$0xf]
    %v105 = vld [vmem:[%s4] sm:$0x1]
    %v107 = vlaneseq
    %v108 = vshrl.u32 %v107, 7
    %v109 = vsub.s32 0, %v108
    %v110 = vrot.slane %v105, %v109
    %v120 = vunpack.c.l.b16 %v81
    %v121 = vunpack.c.l.b16 %v82
    %v122 = vunpack.c.l.b16 %v83
    %v123 = vunpack.c.l.b16 %v84
    %v124 = vunpack.c.l.b16 %v85
    %v125 = vunpack.c.l.b16 %v86
    %v126 = vunpack.c.l.b16 %v87
    %v127 = vunpack.c.l.b16 %v88
    %v128 = vpack.c.b16 %v121, %v120
    %v129 = vpack.c.b16 %v123, %v122
    %v130 = vpack.c.b16 %v125, %v124
    %v131 = vpack.c.b16 %v127, %v126
    %v152 = vunpack.c.l.b16 %v89
    %v153 = vunpack.c.l.b16 %v90
    %v154 = vunpack.c.l.b16 %v91
    %v155 = vunpack.c.l.b16 %v92
    %v156 = vunpack.c.l.b16 %v93
    %v157 = vunpack.c.l.b16 %v94
    %v158 = vunpack.c.l.b16 %v95
    %v159 = vunpack.c.l.b16 %v96
    %v160 = vunpack.c.l.b16 %v97
    %v161 = vunpack.c.l.b16 %v98
    %v162 = vunpack.c.l.b16 %v99
    %v163 = vunpack.c.l.b16 %v100
    %v164 = vunpack.c.l.b16 %v101
    %v165 = vunpack.c.l.b16 %v102
    %v166 = vunpack.c.l.b16 %v103
    %v167 = vunpack.c.l.b16 %v104
    %v168 = vpack.c.b16 %v153, %v152
    %v169 = vpack.c.b16 %v155, %v154
    %v170 = vpack.c.b16 %v157, %v156
    %v171 = vpack.c.b16 %v159, %v158
    %v172 = vpack.c.b16 %v161, %v160
    %v173 = vpack.c.b16 %v163, %v162
    %v174 = vpack.c.b16 %v165, %v164
    %v175 = vpack.c.b16 %v167, %v166
    %184 = vmatprep.subr.bf16.mxu0 0
    %185 = vmatpush1.bf16.msra.mxu0 %v168
    %186 = vmatprep.subr.bf16.mxu0 0
    %187 = vmatpush1.bf16.msra.mxu0 %v169
    %188 = vmatprep.subr.bf16.mxu0 0
    %189 = vmatpush1.bf16.msra.mxu0 %v170
    %190 = vmatprep.subr.bf16.mxu0 0
    %191 = vmatpush1.bf16.msra.mxu0 %v171
    %192 = vmatprep.subr.bf16.mxu0 0
    %193 = vmatpush1.bf16.msra.mxu0 %v172
    %194 = vmatprep.subr.bf16.mxu0 0
    %195 = vmatpush1.bf16.msra.mxu0 %v173
    %196 = vmatprep.subr.bf16.mxu0 0
    %197 = vmatpush1.bf16.msra.mxu0 %v174
    %198 = vmatprep.subr.bf16.mxu0 0
    %199 = vmatpush1.bf16.msra.mxu0 %v175
    %200 = vmatprep.subr.bf16.mxu0 0
    %201 = vmatpush1.bf16.msra.mxu0 0
    %202 = vmatprep.subr.bf16.mxu0 0
    %203 = vmatpush1.bf16.msra.mxu0 0
    %204 = vmatprep.subr.bf16.mxu0 0
    %205 = vmatpush1.bf16.msra.mxu0 0
    %206 = vmatprep.subr.bf16.mxu0 0
    %207 = vmatpush1.bf16.msra.mxu0 0
    %208 = vmatprep.subr.bf16.mxu0 0
    %209 = vmatpush1.bf16.msra.mxu0 0
    %210 = vmatprep.subr.bf16.mxu0 0
    %211 = vmatpush1.bf16.msra.mxu0 0
    %212 = vmatprep.subr.bf16.mxu0 0
    %213 = vmatpush1.bf16.msra.mxu0 0
    %214 = vmatprep.subr.bf16.mxu0 0
    %215 = vmatpush1.bf16.msra.mxu0 0
    %216 = vmatprep.mubr.bf16.mxu0 0
    %217 = vmatmul.mubr.bf16.gmra.mrb[0].mxu0 %v128
    %v218 = vpop.f32.mrb[0].mxu0
    %v219 = vadd.f32 %v110, %v218
    %v220 = vpop.f32.mrb[0].mxu0
    %v221 = vpop.f32.mrb[0].mxu0
    %v222 = vadd.f32 %v110, %v221
    %v223 = vpop.f32.mrb[0].mxu0
    %224 = vmatprep.mubr.bf16.mxu0 0
    %225 = vmatmul.mubr.bf16.gmra.mrb[0].mxu0 %v129
    %v226 = vpop.f32.mrb[0].mxu0
    %v227 = vadd.f32 %v110, %v226
    %v228 = vpop.f32.mrb[0].mxu0
    %v229 = vpop.f32.mrb[0].mxu0
    %v230 = vadd.f32 %v110, %v229
    %v231 = vpop.f32.mrb[0].mxu0
    %232 = vmatprep.mubr.bf16.mxu0 0
    %233 = vmatmul.mubr.bf16.gmra.mrb[0].mxu0 %v130
    %v234 = vpop.f32.mrb[0].mxu0
    %v235 = vadd.f32 %v110, %v234
    %v236 = vpop.f32.mrb[0].mxu0
    %v237 = vpop.f32.mrb[0].mxu0
    %v238 = vadd.f32 %v110, %v237
    %v239 = vpop.f32.mrb[0].mxu0
    %240 = vmatprep.mubr.bf16.mxu0 0
    %241 = vmatmul.mubr.bf16.gmra.mrb[0].mxu0 %v131
    %v242 = vpop.f32.mrb[0].mxu0
    %v243 = vadd.f32 %v110, %v242
    %v244 = vpop.f32.mrb[0].mxu0
    %v245 = vpop.f32.mrb[0].mxu0
    %v246 = vadd.f32 %v110, %v245
    %v247 = vpop.f32.mrb[0].mxu0
    %248 = vdwg.mxu0
    %249 = vst [vmem:[#allocation3] sm:$0xff] %v219
    %250 = vst [vmem:[#allocation3 + $0x8] sm:$0xff] %v222
    %251 = vst [vmem:[#allocation3 + $0x10] sm:$0xff] %v227
    %252 = vst [vmem:[#allocation3 + $0x18] sm:$0xff] %v230
    %253 = vst [vmem:[#allocation3 + $0x20] sm:$0xff] %v235
    %254 = vst [vmem:[#allocation3 + $0x28] sm:$0xff] %v238
    %255 = vst [vmem:[#allocation3 + $0x30] sm:$0xff] %v243
    %256 = vst [vmem:[#allocation3 + $0x38] sm:$0xff] %v246
    %v257 = vld [vmem:[#allocation10] sm:$0xf]
    %v258 = vld [vmem:[#allocation10 + $0x4] sm:$0xf]
    %v259 = vld [vmem:[#allocation10 + $0x8] sm:$0xf]
    %v260 = vld [vmem:[#allocation10 + $0xc] sm:$0xf]
    %v261 = vld [vmem:[#allocation10 + $0x10] sm:$0xf]
    %v262 = vld [vmem:[#allocation10 + $0x14] sm:$0xf]
    %v263 = vld [vmem:[#allocation10 + $0x18] sm:$0xf]
    %v264 = vld [vmem:[#allocation10 + $0x1c] sm:$0xf]
    %v265 = vld [vmem:[#allocation10 + $0x20] sm:$0xf]
    %v266 = vld [vmem:[#allocation10 + $0x24] sm:$0xf]
    %v267 = vld [vmem:[#allocation10 + $0x28] sm:$0xf]
    %v268 = vld [vmem:[#allocation10 + $0x2c] sm:$0xf]
    %v269 = vld [vmem:[#allocation10 + $0x30] sm:$0xf]
    %v270 = vld [vmem:[#allocation10 + $0x34] sm:$0xf]
    %v271 = vld [vmem:[#allocation10 + $0x38] sm:$0xf]
    %v272 = vld [vmem:[#allocation10 + $0x3c] sm:$0xf]
    %s273 = smul.u32 0, 8
    %s274 = ssub.s32 8, %s273
    %v275 = vld [vmem:[#allocation2] sm:$0xff]
    %v276 = vld [vmem:[#allocation3] sm:$0xff]
    %v277 = vpack.c.bf16 %v275, %v275
    %v294 = vunpack.c.l.b16 %v257
    %v295 = vunpack.c.l.b16 %v258
    %v296 = vunpack.c.l.b16 %v259
    %v297 = vunpack.c.l.b16 %v260
    %v298 = vunpack.c.l.b16 %v261
    %v299 = vunpack.c.l.b16 %v262
    %v300 = vunpack.c.l.b16 %v263
    %v301 = vunpack.c.l.b16 %v264
    %v302 = vunpack.c.l.b16 %v265
    %v303 = vunpack.c.l.b16 %v266
    %v304 = vunpack.c.l.b16 %v267
    %v305 = vunpack.c.l.b16 %v268
    %v306 = vunpack.c.l.b16 %v269
    %v307 = vunpack.c.l.b16 %v270
    %v308 = vunpack.c.l.b16 %v271
    %v309 = vunpack.c.l.b16 %v272
    %v310 = vpack.c.b16 %v295, %v294
    %v311 = vpack.c.b16 %v297, %v296
    %v312 = vpack.c.b16 %v299, %v298
    %v313 = vpack.c.b16 %v301, %v300
    %v314 = vpack.c.b16 %v303, %v302
    %v315 = vpack.c.b16 %v305, %v304
    %v316 = vpack.c.b16 %v307, %v306
    %v317 = vpack.c.b16 %v309, %v308
    %326 = vmatprep.subr.bf16.mxu0 0
    %327 = vmatpush1.bf16.msra.mxu0 %v310
    %328 = vmatprep.subr.bf16.mxu0 0
    %329 = vmatpush1.bf16.msra.mxu0 %v311
    %330 = vmatprep.subr.bf16.mxu0 0
    %331 = vmatpush1.bf16.msra.mxu0 %v312
    %332 = vmatprep.subr.bf16.mxu0 0
    %333 = vmatpush1.bf16.msra.mxu0 %v313
    %334 = vmatprep.subr.bf16.mxu0 0
    %335 = vmatpush1.bf16.msra.mxu0 %v314
    %336 = vmatprep.subr.bf16.mxu0 0
    %337 = vmatpush1.bf16.msra.mxu0 %v315
    %338 = vmatprep.subr.bf16.mxu0 0
    %339 = vmatpush1.bf16.msra.mxu0 %v316
    %340 = vmatprep.subr.bf16.mxu0 0
    %341 = vmatpush1.bf16.msra.mxu0 %v317
    %342 = vmatprep.subr.bf16.mxu0 0
    %343 = vmatpush1.bf16.msra.mxu0 0
    %344 = vmatprep.subr.bf16.mxu0 0
    %345 = vmatpush1.bf16.msra.mxu0 0
    %346 = vmatprep.subr.bf16.mxu0 0
    %347 = vmatpush1.bf16.msra.mxu0 0
    %348 = vmatprep.subr.bf16.mxu0 0
    %349 = vmatpush1.bf16.msra.mxu0 0
    %350 = vmatprep.subr.bf16.mxu0 0
    %351 = vmatpush1.bf16.msra.mxu0 0
    %352 = vmatprep.subr.bf16.mxu0 0
    %353 = vmatpush1.bf16.msra.mxu0 0
    %354 = vmatprep.subr.bf16.mxu0 0
    %355 = vmatpush1.bf16.msra.mxu0 0
    %356 = vmatprep.subr.bf16.mxu0 0
    %357 = vmatpush1.bf16.msra.mxu0 0
    %358 = vmatprep.mubr.bf16.mxu0 0
    %359 = vmatmul.mubr.bf16.gmra.mrb[0].mxu0 %v277
    %v360 = vpop.f32.mrb[0].mxu0
    %v361 = vadd.f32 0.0, %v360
    %v362 = vpop.f32.mrb[0].mxu0
    %v363 = vpop.f32.mrb[0].mxu0
    %v364 = vpop.f32.mrb[0].mxu0
    %365 = vdwg.mxu0
    %v366 = vadd.f32 %v276, %v361
    %v367 = vtanh.pop %v366
    %p368 = scmp.gt.s32.totalorder %s274, 0
    %s369 = scalar_select %p368, 1, 0
    %v370 = vstv %s369
    %vm371 = vcmp.eq.s32.totalorder %v370, 1
    %v372 = vsel %vm371, %v367, %v275
    %s373 = scalar_lea.vmem [#allocation3], 8
    %v374 = vld [vmem:[%s373] sm:$0xff]
    %v375 = vpack.c.bf16 %v372, %v372
    %376 = vmatprep.subr.bf16.mxu0 0
    %377 = vmatpush1.bf16.msra.mxu0 %v310
    %378 = vmatprep.subr.bf16.mxu0 0
    %379 = vmatpush1.bf16.msra.mxu0 %v311
    %380 = vmatprep.subr.bf16.mxu0 0
    %381 = vmatpush1.bf16.msra.mxu0 %v312
    %382 = vmatprep.subr.bf16.mxu0 0
    %383 = vmatpush1.bf16.msra.mxu0 %v313
    %384 = vmatprep.subr.bf16.mxu0 0
    %385 = vmatpush1.bf16.msra.mxu0 %v314
    %386 = vmatprep.subr.bf16.mxu0 0
    %387 = vmatpush1.bf16.msra.mxu0 %v315
    %388 = vmatprep.subr.bf16.mxu0 0
    %389 = vmatpush1.bf16.msra.mxu0 %v316
    %390 = vmatprep.subr.bf16.mxu0 0
    %391 = vmatpush1.bf16.msra.mxu0 %v317
    %392 = vmatprep.subr.bf16.mxu0 0
    %393 = vmatpush1.bf16.msra.mxu0 0
    %394 = vmatprep.subr.bf16.mxu0 0
    %395 = vmatpush1.bf16.msra.mxu0 0
    %396 = vmatprep.subr.bf16.mxu0 0
    %397 = vmatpush1.bf16.msra.mxu0 0
    %398 = vmatprep.subr.bf16.mxu0 0
    %399 = vmatpush1.bf16.msra.mxu0 0
    %400 = vmatprep.subr.bf16.mxu0 0
    %401 = vmatpush1.bf16.msra.mxu0 0
    %402 = vmatprep.subr.bf16.mxu0 0
    %403 = vmatpush1.bf16.msra.mxu0 0
    %404 = vmatprep.subr.bf16.mxu0 0
    %405 = vmatpush1.bf16.msra.mxu0 0
    %406 = vmatprep.subr.bf16.mxu0 0
    %407 = vmatpush1.bf16.msra.mxu0 0
    %408 = vmatprep.mubr.bf16.mxu0 0
    %409 = vmatmul.mubr.bf16.gmra.mrb[0].mxu0 %v375
    %v410 = vpop.f32.mrb[0].mxu0
    %v411 = vadd.f32 0.0, %v410
    %v412 = vpop.f32.mrb[0].mxu0
    %v413 = vpop.f32.mrb[0].mxu0
    %v414 = vpop.f32.mrb[0].mxu0
    %415 = vdwg.mxu0
    %v416 = vadd.f32 %v374, %v411
    %v417 = vtanh.pop %v416
    %p418 = scmp.gt.s32.totalorder %s274, 1
    %s419 = scalar_select %p418, 1, 0
    %v420 = vstv %s419
    %vm421 = vcmp.eq.s32.totalorder %v420, 1
    %v422 = vsel %vm421, %v417, %v372
    %s423 = scalar_lea.vmem [#allocation3], 16
    %v424 = vld [vmem:[%s423] sm:$0xff]
    %v425 = vpack.c.bf16 %v422, %v422
    %426 = vmatprep.subr.bf16.mxu0 0
    %427 = vmatpush1.bf16.msra.mxu0 %v310
    %428 = vmatprep.subr.bf16.mxu0 0
    %429 = vmatpush1.bf16.msra.mxu0 %v311
    %430 = vmatprep.subr.bf16.mxu0 0
    %431 = vmatpush1.bf16.msra.mxu0 %v312
    %432 = vmatprep.subr.bf16.mxu0 0
    %433 = vmatpush1.bf16.msra.mxu0 %v313
    %434 = vmatprep.subr.bf16.mxu0 0
    %435 = vmatpush1.bf16.msra.mxu0 %v314
    %436 = vmatprep.subr.bf16.mxu0 0
    %437 = vmatpush1.bf16.msra.mxu0 %v315
    %438 = vmatprep.subr.bf16.mxu0 0
    %439 = vmatpush1.bf16.msra.mxu0 %v316
    %440 = vmatprep.subr.bf16.mxu0 0
    %441 = vmatpush1.bf16.msra.mxu0 %v317
    %442 = vmatprep.subr.bf16.mxu0 0
    %443 = vmatpush1.bf16.msra.mxu0 0
    %444 = vmatprep.subr.bf16.mxu0 0
    %445 = vmatpush1.bf16.msra.mxu0 0
    %446 = vmatprep.subr.bf16.mxu0 0
    %447 = vmatpush1.bf16.msra.mxu0 0
    %448 = vmatprep.subr.bf16.mxu0 0
    %449 = vmatpush1.bf16.msra.mxu0 0
    %450 = vmatprep.subr.bf16.mxu0 0
    %451 = vmatpush1.bf16.msra.mxu0 0
    %452 = vmatprep.subr.bf16.mxu0 0
    %453 = vmatpush1.bf16.msra.mxu0 0
    %454 = vmatprep.subr.bf16.mxu0 0
    %455 = vmatpush1.bf16.msra.mxu0 0
    %456 = vmatprep.subr.bf16.mxu0 0
    %457 = vmatpush1.bf16.msra.mxu0 0
    %458 = vmatprep.mubr.bf16.mxu0 0
    %459 = vmatmul.mubr.bf16.gmra.mrb[0].mxu0 %v425
    %v460 = vpop.f32.mrb[0].mxu0
    %v461 = vadd.f32 0.0, %v460
    %v462 = vpop.f32.mrb[0].mxu0
    %v463 = vpop.f32.mrb[0].mxu0
    %v464 = vpop.f32.mrb[0].mxu0
    %465 = vdwg.mxu0
    %v466 = vadd.f32 %v424, %v461
    %v467 = vtanh.pop %v466
    %p468 = scmp.gt.s32.totalorder %s274, 2
    %s469 = scalar_select %p468, 1, 0
    %v470 = vstv %s469
    %vm471 = vcmp.eq.s32.totalorder %v470, 1
    %v472 = vsel %vm471, %v467, %v422
    %s473 = scalar_lea.vmem [#allocation3], 24
    %v474 = vld [vmem:[%s473] sm:$0xff]
    %v475 = vpack.c.bf16 %v472, %v472
    %476 = vmatprep.subr.bf16.mxu0 0
    %477 = vmatpush1.bf16.msra.mxu0 %v310
    %478 = vmatprep.subr.bf16.mxu0 0
    %479 = vmatpush1.bf16.msra.mxu0 %v311
    %480 = vmatprep.subr.bf16.mxu0 0
    %481 = vmatpush1.bf16.msra.mxu0 %v312
    %482 = vmatprep.subr.bf16.mxu0 0
    %483 = vmatpush1.bf16.msra.mxu0 %v313
    %484 = vmatprep.subr.bf16.mxu0 0
    %485 = vmatpush1.bf16.msra.mxu0 %v314
    %486 = vmatprep.subr.bf16.mxu0 0
    %487 = vmatpush1.bf16.msra.mxu0 %v315
    %488 = vmatprep.subr.bf16.mxu0 0
    %489 = vmatpush1.bf16.msra.mxu0 %v316
    %490 = vmatprep.subr.bf16.mxu0 0
    %491 = vmatpush1.bf16.msra.mxu0 %v317
    %492 = vmatprep.subr.bf16.mxu0 0
    %493 = vmatpush1.bf16.msra.mxu0 0
    %494 = vmatprep.subr.bf16.mxu0 0
    %495 = vmatpush1.bf16.msra.mxu0 0
    %496 = vmatprep.subr.bf16.mxu0 0
    %497 = vmatpush1.bf16.msra.mxu0 0
    %498 = vmatprep.subr.bf16.mxu0 0
    %499 = vmatpush1.bf16.msra.mxu0 0
    %500 = vmatprep.subr.bf16.mxu0 0
    %501 = vmatpush1.bf16.msra.mxu0 0
    %502 = vmatprep.subr.bf16.mxu0 0
    %503 = vmatpush1.bf16.msra.mxu0 0
    %504 = vmatprep.subr.bf16.mxu0 0
    %505 = vmatpush1.bf16.msra.mxu0 0
    %506 = vmatprep.subr.bf16.mxu0 0
    %507 = vmatpush1.bf16.msra.mxu0 0
    %508 = vmatprep.mubr.bf16.mxu0 0
    %509 = vmatmul.mubr.bf16.gmra.mrb[0].mxu0 %v475
    %v510 = vpop.f32.mrb[0].mxu0
    %v511 = vadd.f32 0.0, %v510
    %v512 = vpop.f32.mrb[0].mxu0
    %v513 = vpop.f32.mrb[0].mxu0
    %v514 = vpop.f32.mrb[0].mxu0
    %515 = vdwg.mxu0
    %v516 = vadd.f32 %v474, %v511
    %v517 = vtanh.pop %v516
    %p518 = scmp.gt.s32.totalorder %s274, 3
    %s519 = scalar_select %p518, 1, 0
    %v520 = vstv %s519
    %vm521 = vcmp.eq.s32.totalorder %v520, 1
    %v522 = vsel %vm521, %v517, %v472
    %s523 = scalar_lea.vmem [#allocation3], 32
    %v524 = vld [vmem:[%s523] sm:$0xff]
    %v525 = vpack.c.bf16 %v522, %v522
    %526 = vmatprep.subr.bf16.mxu0 0
    %527 = vmatpush1.bf16.msra.mxu0 %v310
    %528 = vmatprep.subr.bf16.mxu0 0
    %529 = vmatpush1.bf16.msra.mxu0 %v311
    %530 = vmatprep.subr.bf16.mxu0 0
    %531 = vmatpush1.bf16.msra.mxu0 %v312
    %532 = vmatprep.subr.bf16.mxu0 0
    %533 = vmatpush1.bf16.msra.mxu0 %v313
    %534 = vmatprep.subr.bf16.mxu0 0
    %535 = vmatpush1.bf16.msra.mxu0 %v314
    %536 = vmatprep.subr.bf16.mxu0 0
    %537 = vmatpush1.bf16.msra.mxu0 %v315
    %538 = vmatprep.subr.bf16.mxu0 0
    %539 = vmatpush1.bf16.msra.mxu0 %v316
    %540 = vmatprep.subr.bf16.mxu0 0
    %541 = vmatpush1.bf16.msra.mxu0 %v317
    %542 = vmatprep.subr.bf16.mxu0 0
    %543 = vmatpush1.bf16.msra.mxu0 0
    %544 = vmatprep.subr.bf16.mxu0 0
    %545 = vmatpush1.bf16.msra.mxu0 0
    %546 = vmatprep.subr.bf16.mxu0 0
    %547 = vmatpush1.bf16.msra.mxu0 0
    %548 = vmatprep.subr.bf16.mxu0 0
    %549 = vmatpush1.bf16.msra.mxu0 0
    %550 = vmatprep.subr.bf16.mxu0 0
    %551 = vmatpush1.bf16.msra.mxu0 0
    %552 = vmatprep.subr.bf16.mxu0 0
    %553 = vmatpush1.bf16.msra.mxu0 0
    %554 = vmatprep.subr.bf16.mxu0 0
    %555 = vmatpush1.bf16.msra.mxu0 0
    %556 = vmatprep.subr.bf16.mxu0 0
    %557 = vmatpush1.bf16.msra.mxu0 0
    %558 = vmatprep.mubr.bf16.mxu0 0
    %559 = vmatmul.mubr.bf16.gmra.mrb[0].mxu0 %v525
    %v560 = vpop.f32.mrb[0].mxu0
    %v561 = vadd.f32 0.0, %v560
    %v562 = vpop.f32.mrb[0].mxu0
    %v563 = vpop.f32.mrb[0].mxu0
    %v564 = vpop.f32.mrb[0].mxu0
    %565 = vdwg.mxu0
    %v566 = vadd.f32 %v524, %v561
    %v567 = vtanh.pop %v566
    %p568 = scmp.gt.s32.totalorder %s274, 4
    %s569 = scalar_select %p568, 1, 0
    %v570 = vstv %s569
    %vm571 = vcmp.eq.s32.totalorder %v570, 1
    %v572 = vsel %vm571, %v567, %v522
    %s573 = scalar_lea.vmem [#allocation3], 40
    %v574 = vld [vmem:[%s573] sm:$0xff]
    %v575 = vpack.c.bf16 %v572, %v572
    %576 = vmatprep.subr.bf16.mxu0 0
    %577 = vmatpush1.bf16.msra.mxu0 %v310
    %578 = vmatprep.subr.bf16.mxu0 0
    %579 = vmatpush1.bf16.msra.mxu0 %v311
    %580 = vmatprep.subr.bf16.mxu0 0
    %581 = vmatpush1.bf16.msra.mxu0 %v312
    %582 = vmatprep.subr.bf16.mxu0 0
    %583 = vmatpush1.bf16.msra.mxu0 %v313
    %584 = vmatprep.subr.bf16.mxu0 0
    %585 = vmatpush1.bf16.msra.mxu0 %v314
    %586 = vmatprep.subr.bf16.mxu0 0
    %587 = vmatpush1.bf16.msra.mxu0 %v315
    %588 = vmatprep.subr.bf16.mxu0 0
    %589 = vmatpush1.bf16.msra.mxu0 %v316
    %590 = vmatprep.subr.bf16.mxu0 0
    %591 = vmatpush1.bf16.msra.mxu0 %v317
    %592 = vmatprep.subr.bf16.mxu0 0
    %593 = vmatpush1.bf16.msra.mxu0 0
    %594 = vmatprep.subr.bf16.mxu0 0
    %595 = vmatpush1.bf16.msra.mxu0 0
    %596 = vmatprep.subr.bf16.mxu0 0
    %597 = vmatpush1.bf16.msra.mxu0 0
    %598 = vmatprep.subr.bf16.mxu0 0
    %599 = vmatpush1.bf16.msra.mxu0 0
    %600 = vmatprep.subr.bf16.mxu0 0
    %601 = vmatpush1.bf16.msra.mxu0 0
    %602 = vmatprep.subr.bf16.mxu0 0
    %603 = vmatpush1.bf16.msra.mxu0 0
    %604 = vmatprep.subr.bf16.mxu0 0
    %605 = vmatpush1.bf16.msra.mxu0 0
    %606 = vmatprep.subr.bf16.mxu0 0
    %607 = vmatpush1.bf16.msra.mxu0 0
    %608 = vmatprep.mubr.bf16.mxu0 0
    %609 = vmatmul.mubr.bf16.gmra.mrb[0].mxu0 %v575
    %v610 = vpop.f32.mrb[0].mxu0
    %v611 = vadd.f32 0.0, %v610
    %v612 = vpop.f32.mrb[0].mxu0
    %v613 = vpop.f32.mrb[0].mxu0
    %v614 = vpop.f32.mrb[0].mxu0
    %615 = vdwg.mxu0
    %v616 = vadd.f32 %v574, %v611
    %v617 = vtanh.pop %v616
    %p618 = scmp.gt.s32.totalorder %s274, 5
    %s619 = scalar_select %p618, 1, 0
    %v620 = vstv %s619
    %vm621 = vcmp.eq.s32.totalorder %v620, 1
    %v622 = vsel %vm621, %v617, %v572
    %s623 = scalar_lea.vmem [#allocation3], 48
    %v624 = vld [vmem:[%s623] sm:$0xff]
    %v625 = vpack.c.bf16 %v622, %v622
    %626 = vmatprep.subr.bf16.mxu0 0
    %627 = vmatpush1.bf16.msra.mxu0 %v310
    %628 = vmatprep.subr.bf16.mxu0 0
    %629 = vmatpush1.bf16.msra.mxu0 %v311
    %630 = vmatprep.subr.bf16.mxu0 0
    %631 = vmatpush1.bf16.msra.mxu0 %v312
    %632 = vmatprep.subr.bf16.mxu0 0
    %633 = vmatpush1.bf16.msra.mxu0 %v313
    %634 = vmatprep.subr.bf16.mxu0 0
    %635 = vmatpush1.bf16.msra.mxu0 %v314
    %636 = vmatprep.subr.bf16.mxu0 0
    %637 = vmatpush1.bf16.msra.mxu0 %v315
    %638 = vmatprep.subr.bf16.mxu0 0
    %639 = vmatpush1.bf16.msra.mxu0 %v316
    %640 = vmatprep.subr.bf16.mxu0 0
    %641 = vmatpush1.bf16.msra.mxu0 %v317
    %642 = vmatprep.subr.bf16.mxu0 0
    %643 = vmatpush1.bf16.msra.mxu0 0
    %644 = vmatprep.subr.bf16.mxu0 0
    %645 = vmatpush1.bf16.msra.mxu0 0
    %646 = vmatprep.subr.bf16.mxu0 0
    %647 = vmatpush1.bf16.msra.mxu0 0
    %648 = vmatprep.subr.bf16.mxu0 0
    %649 = vmatpush1.bf16.msra.mxu0 0
    %650 = vmatprep.subr.bf16.mxu0 0
    %651 = vmatpush1.bf16.msra.mxu0 0
    %652 = vmatprep.subr.bf16.mxu0 0
    %653 = vmatpush1.bf16.msra.mxu0 0
    %654 = vmatprep.subr.bf16.mxu0 0
    %655 = vmatpush1.bf16.msra.mxu0 0
    %656 = vmatprep.subr.bf16.mxu0 0
    %657 = vmatpush1.bf16.msra.mxu0 0
    %658 = vmatprep.mubr.bf16.mxu0 0
    %659 = vmatmul.mubr.bf16.gmra.mrb[0].mxu0 %v625
    %v660 = vpop.f32.mrb[0].mxu0
    %v661 = vadd.f32 0.0, %v660
    %v662 = vpop.f32.mrb[0].mxu0
    %v663 = vpop.f32.mrb[0].mxu0
    %v664 = vpop.f32.mrb[0].mxu0
    %665 = vdwg.mxu0
    %v666 = vadd.f32 %v624, %v661
    %v667 = vtanh.pop %v666
    %p668 = scmp.gt.s32.totalorder %s274, 6
    %s669 = scalar_select %p668, 1, 0
    %v670 = vstv %s669
    %vm671 = vcmp.eq.s32.totalorder %v670, 1
    %v672 = vsel %vm671, %v667, %v622
    %s673 = scalar_lea.vmem [#allocation3], 56
    %v674 = vld [vmem:[%s673] sm:$0xff]
    %v675 = vpack.c.bf16 %v672, %v672
    %676 = vmatprep.subr.bf16.mxu0 0
    %677 = vmatpush1.bf16.msra.mxu0 %v310
    %678 = vmatprep.subr.bf16.mxu0 0
    %679 = vmatpush1.bf16.msra.mxu0 %v311
    %680 = vmatprep.subr.bf16.mxu0 0
    %681 = vmatpush1.bf16.msra.mxu0 %v312
    %682 = vmatprep.subr.bf16.mxu0 0
    %683 = vmatpush1.bf16.msra.mxu0 %v313
    %684 = vmatprep.subr.bf16.mxu0 0
    %685 = vmatpush1.bf16.msra.mxu0 %v314
    %686 = vmatprep.subr.bf16.mxu0 0
    %687 = vmatpush1.bf16.msra.mxu0 %v315
    %688 = vmatprep.subr.bf16.mxu0 0
    %689 = vmatpush1.bf16.msra.mxu0 %v316
    %690 = vmatprep.subr.bf16.mxu0 0
    %691 = vmatpush1.bf16.msra.mxu0 %v317
    %692 = vmatprep.subr.bf16.mxu0 0
    %693 = vmatpush1.bf16.msra.mxu0 0
    %694 = vmatprep.subr.bf16.mxu0 0
    %695 = vmatpush1.bf16.msra.mxu0 0
    %696 = vmatprep.subr.bf16.mxu0 0
    %697 = vmatpush1.bf16.msra.mxu0 0
    %698 = vmatprep.subr.bf16.mxu0 0
    %699 = vmatpush1.bf16.msra.mxu0 0
    %700 = vmatprep.subr.bf16.mxu0 0
    %701 = vmatpush1.bf16.msra.mxu0 0
    %702 = vmatprep.subr.bf16.mxu0 0
    %703 = vmatpush1.bf16.msra.mxu0 0
    %704 = vmatprep.subr.bf16.mxu0 0
    %705 = vmatpush1.bf16.msra.mxu0 0
    %706 = vmatprep.subr.bf16.mxu0 0
    %707 = vmatpush1.bf16.msra.mxu0 0
    %708 = vmatprep.mubr.bf16.mxu0 0
    %709 = vmatmul.mubr.bf16.gmra.mrb[0].mxu0 %v675
    %v710 = vpop.f32.mrb[0].mxu0
    %v711 = vadd.f32 0.0, %v710
    %v712 = vpop.f32.mrb[0].mxu0
    %v713 = vpop.f32.mrb[0].mxu0
    %v714 = vpop.f32.mrb[0].mxu0
    %715 = vdwg.mxu0
    %v716 = vadd.f32 %v674, %v711
    %v717 = vtanh.pop %v716
    %p718 = scmp.gt.s32.totalorder %s274, 7
    %s719 = scalar_select %p718, 1, 0
    %v720 = vstv %s719
    %vm721 = vcmp.eq.s32.totalorder %v720, 1
    %v722 = vsel %vm721, %v717, %v672
    %723 = vst [vmem:[#allocation2] sm:$0xff] %v722
    // Predicated region
    $region42: #{tpu_custom_call.1} parent=1 // pred_check
      %p724 = pneg %p75
    $region43: #{tpu_custom_call.1} parent=1 // pred_check_branch
      %726 = sbr.rel (%p724) target = $region45
    $region44: #{tpu_custom_call.1} parent=1 // pred_region
      %727 = vst [vmem:[#allocation12] sm:$0xff] %v722
    $region45: #{tpu_custom_call.1} parent=1 // pred_fallthru
      _
    // Predicated region
    $region46: #{tpu_custom_call.1} parent=1 // pred_check
      _
    $region47: #{tpu_custom_call.1} parent=1 // pred_check_branch
      %729 = sbr.rel (0) target = $region49
    $region48: #{tpu_custom_call.1} parent=1 // pred_region
      %s731 = ssub.s32 128, 128
      %732 = vsyncadd [#allocation6], %s731
      %s734 = sshll.u32 [#allocation12], 4
      %s735 = int_to_ptr.vmem [resolvable:$true] %s734
      %737 = dma.vmem_to_hbm [thread:$0]  %s735, 128, %s5, [#allocation6]
    $region49: #{tpu_custom_call.1} parent=1 // pred_fallthru
      _
    // Predicated region
    $region50: #{tpu_custom_call.1} parent=1 // pred_check
      _
    $region51: #{tpu_custom_call.1} parent=1 // pred_check_branch
      %739 = sbr.rel (0) target = $region53
    $region52: #{tpu_custom_call.1} parent=1 // pred_region
      %740 = dma.done [#allocation6], 128
    $region53: #{tpu_custom_call.1} parent=1 // pred_fallthru
      _
    %741 = vsyncpa [#allocation5], 1
    %742 = vsyncpa [#allocation8], 1
    %743 = vsyncpa [#allocation11], 1
    %744 = vsyncpa [#allocation6], 1

// kernel: tpu_custom_call.1
$region0: #{tpu_custom_call.1}
  #allocation0 [shape = 'u32[]', space=smem, size = 0x4, offset = 0x4, fixed_abs, tag = 'smem constant byte address 0x4 - core index']
  #allocation1 [shape = 'u32[144,128]{1,0:T(1,128)}', space=vmem, size = 0x12000, scoped, tag = 'internal scratch']
  #allocation2 [shape = 'f32[8,128]{1,0:T(8,128)}', space=vmem, size = 0x1000, scoped, tag = 'scratch operand']
  #allocation3 [shape = 'f32[8,8,128]{2,1,0:T(8,128)}', space=vmem, size = 0x8000, scoped, tag = 'scratch operand']
  %s0 = inlined_call_operand.hbm [shape: bf16[8,8,128], index: 0, kind: input, shape index: {}]
  %s1 = inlined_call_operand.hbm [shape: f32[8,128], index: 1, kind: input, shape index: {}]
  %s2 = inlined_call_operand.hbm [shape: bf16[128,128], index: 2, kind: input, shape index: {}]
  %s3 = inlined_call_operand.hbm [shape: bf16[128,128], index: 3, kind: input, shape index: {}]
  %s4 = inlined_call_operand.vmem [shape: f32[1,128], index: 4, kind: input, shape index: {}]
  %s5 = inlined_call_operand.hbm [shape: f32[8,128], index: 5, kind: output, shape index: {}]
  %s6 = sld [smem:[#allocation0]]
  $region54: #{tpu_custom_call.1} parent=0
    _
  %s8 = ssub.s32 1, %s6
  %s9 = scalar_select 0, %s8, %s6
  $region1: #{tpu_custom_call.1} parent=0
    #allocation4 [shape = 'u8[16384]{0}', space=vmem, size = 0x4000, scoped, tag = 'input window, operand 0, single buffered']
    #allocation5 [shape = 's32[1]{0}', space=sflag, size = 0x4, scoped, tag = 'scoped memory for tpu_custom_call.1']
    #allocation6 [shape = 's32[1]{0}', space=sflag, size = 0x4, scoped, tag = 'scoped memory for tpu_custom_call.1']
    #allocation7 [shape = 'u8[4096]{0}', space=vmem, size = 0x1000, scoped, tag = 'input window, operand 1, single buffered']
    #allocation8 [shape = 's32[1]{0}', space=sflag, size = 0x4, scoped, tag = 'scoped memory for tpu_custom_call.1']
    #allocation9 [shape = 'u8[32768]{0}', space=vmem, size = 0x8000, scoped, tag = 'input window, operand 2, single buffered']
    #allocation10 [shape = 'u8[32768]{0}', space=vmem, size = 0x8000, scoped, tag = 'input window, operand 3, single buffered']
    #allocation11 [shape = 's32[1]{0}', space=sflag, size = 0x4, scoped, tag = 'scoped memory for tpu_custom_call.1']
    #allocation12 [shape = 'u8[4096]{0}', space=vmem, size = 0x1000, scoped, tag = 'output window, operand 0, single buffered']
    %10 = vsyncpa [#allocation5], 0
    %11 = vsyncpa [#allocation8], 0
    %12 = vsyncpa [#allocation11], 0
    %13 = vsyncpa [#allocation6], 0
    // Predicated region
    $region2: #{tpu_custom_call.1} parent=1 // pred_check
      _
    $region3: #{tpu_custom_call.1} parent=1 // pred_check_branch
      %15 = sbr.rel (0) target = $region5
    $region4: #{tpu_custom_call.1} parent=1 // pred_region
      %s17 = ssub.s32 512, 512
      %18 = vsyncadd [#allocation5], %s17
      %s19 = sshll.u32 [#allocation4], 4
      %s20 = int_to_ptr.vmem [resolvable:$true] %s19
      %25 = dma.hbm_to_vmem [thread:$0]  %s0, 512, %s20, [#allocation5], 64, 64, 4
    $region5: #{tpu_custom_call.1} parent=1 // pred_fallthru
      _
    // Predicated region
    $region6: #{tpu_custom_call.1} parent=1 // pred_check
      _
    $region7: #{tpu_custom_call.1} parent=1 // pred_check_branch
      %27 = sbr.rel (0) target = $region9
    $region8: #{tpu_custom_call.1} parent=1 // pred_region
      %s29 = ssub.s32 128, 128
      %30 = vsyncadd [#allocation8], %s29
      %s32 = sshll.u32 [#allocation7], 4
      %s33 = int_to_ptr.vmem [resolvable:$true] %s32
      %35 = dma.hbm_to_vmem [thread:$0]  %s1, 128, %s33, [#allocation8]
    $region9: #{tpu_custom_call.1} parent=1 // pred_fallthru
      _
    // Predicated region
    $region10: #{tpu_custom_call.1} parent=1 // pred_check
      _
    $region11: #{tpu_custom_call.1} parent=1 // pred_check_branch
      %37 = sbr.rel (0) target = $region13
    $region12: #{tpu_custom_call.1} parent=1 // pred_region
      %s39 = ssub.s32 1024, 1024
      %40 = vsyncadd [#allocation8], %s39
      %s41 = sshll.u32 [#allocation9], 4
      %s42 = int_to_ptr.vmem [resolvable:$true] %s41
      %47 = dma.hbm_to_vmem [thread:$0]  %s2, 1024, %s42, [#allocation8], 64, 64, 4
    $region13: #{tpu_custom_call.1} parent=1 // pred_fallthru
      _
    // Predicated region
    $region14: #{tpu_custom_call.1} parent=1 // pred_check
      _
    $region15: #{tpu_custom_call.1} parent=1 // pred_check_branch
      %49 = sbr.rel (0) target = $region17
    $region16: #{tpu_custom_call.1} parent=1 // pred_region
      %s51 = ssub.s32 1024, 1024
      %52 = vsyncadd [#allocation11], %s51
      %s53 = sshll.u32 [#allocation10], 4
      %s54 = int_to_ptr.vmem [resolvable:$true] %s53
      %59 = dma.hbm_to_vmem [thread:$0]  %s3, 1024, %s54, [#allocation11], 64, 64, 4
    $region17: #{tpu_custom_call.1} parent=1 // pred_fallthru
      _
    // Predicated region
    $region18: #{tpu_custom_call.1} parent=1 // pred_check
      _
    $region19: #{tpu_custom_call.1} parent=1 // pred_check_branch
      %61 = sbr.rel (0) target = $region21
    $region20: #{tpu_custom_call.1} parent=1 // pred_region
      _
    $region21: #{tpu_custom_call.1} parent=1 // pred_fallthru
      _
    // Predicated region
    $region22: #{tpu_custom_call.1} parent=1 // pred_check
      _
    $region23: #{tpu_custom_call.1} parent=1 // pred_check_branch
      %63 = sbr.rel (0) target = $region25
    $region24: #{tpu_custom_call.1} parent=1 // pred_region
      %64 = dma.done [#allocation5], 512
    $region25: #{tpu_custom_call.1} parent=1 // pred_fallthru
      _
    // Predicated region
    $region26: #{tpu_custom_call.1} parent=1 // pred_check
      _
    $region27: #{tpu_custom_call.1} parent=1 // pred_check_branch
      %66 = sbr.rel (0) target = $region29
    $region28: #{tpu_custom_call.1} parent=1 // pred_region
      %67 = dma.done [#allocation8], 128
    $region29: #{tpu_custom_call.1} parent=1 // pred_fallthru
      _
    // Predicated region
    $region30: #{tpu_custom_call.1} parent=1 // pred_check
      _
    $region31: #{tpu_custom_call.1} parent=1 // pred_check_branch
      %69 = sbr.rel (0) target = $region33
    $region32: #{tpu_custom_call.1} parent=1 // pred_region
      %70 = dma.done [#allocation8], 1024
    $region33: #{tpu_custom_call.1} parent=1 // pred_fallthru
      _
    // Predicated region
    $region34: #{tpu_custom_call.1} parent=1 // pred_check
      _
    $region35: #{tpu_custom_call.1} parent=1 // pred_check_branch
      %72 = sbr.rel (0) target = $region37
    $region36: #{tpu_custom_call.1} parent=1 // pred_region
      %73 = dma.done [#allocation11], 1024
    $region37: #{tpu_custom_call.1} parent=1 // pred_fallthru
      _
    %p75 = scmp.eq.s32.totalorder 0, 0
    // Predicated region
    $region38: #{tpu_custom_call.1} parent=1 // pred_check
      %p76 = pneg %p75
    $region39: #{tpu_custom_call.1} parent=1 // pred_check_branch
      %78 = sbr.rel (%p76) target = $region41
    $region40: #{tpu_custom_call.1} parent=1 // pred_region
      %v79 = vld [vmem:[#allocation7] sm:$0xff]
      %80 = vst [vmem:[#allocation2] sm:$0xff] %v79
    $region41: #{tpu_custom_call.1} parent=1 // pred_fallthru
      _
    %v81 = vld [vmem:[#allocation4] sm:$0xf]
    %v82 = vld [vmem:[#allocation4 + $0x4] sm:$0xf]
    %v83 = vld [vmem:[#allocation4 + $0x8] sm:$0xf]
    %v84 = vld [vmem:[#allocation4 + $0xc] sm:$0xf]
    %v85 = vld [vmem:[#allocation4 + $0x10] sm:$0xf]
    %v86 = vld [vmem:[#allocation4 + $0x14] sm:$0xf]
    %v87 = vld [vmem:[#allocation4 + $0x18] sm:$0xf]
    %v88 = vld [vmem:[#allocation4 + $0x1c] sm:$0xf]
    %v89 = vld [vmem:[#allocation9] sm:$0xf]
    %v90 = vld [vmem:[#allocation9 + $0x4] sm:$0xf]
    %v91 = vld [vmem:[#allocation9 + $0x8] sm:$0xf]
    %v92 = vld [vmem:[#allocation9 + $0xc] sm:$0xf]
    %v93 = vld [vmem:[#allocation9 + $0x10] sm:$0xf]
    %v94 = vld [vmem:[#allocation9 + $0x14] sm:$0xf]
    %v95 = vld [vmem:[#allocation9 + $0x18] sm:$0xf]
    %v96 = vld [vmem:[#allocation9 + $0x1c] sm:$0xf]
    %v97 = vld [vmem:[#allocation9 + $0x20] sm:$0xf]
    %v98 = vld [vmem:[#allocation9 + $0x24] sm:$0xf]
    %v99 = vld [vmem:[#allocation9 + $0x28] sm:$0xf]
    %v100 = vld [vmem:[#allocation9 + $0x2c] sm:$0xf]
    %v101 = vld [vmem:[#allocation9 + $0x30] sm:$0xf]
    %v102 = vld [vmem:[#allocation9 + $0x34] sm:$0xf]
    %v103 = vld [vmem:[#allocation9 + $0x38] sm:$0xf]
    %v104 = vld [vmem:[#allocation9 + $0x3c] sm:$0xf]
    %v105 = vld [vmem:[%s4] sm:$0x1]
    %v107 = vlaneseq
    %v108 = vshrl.u32 %v107, 7
    %v109 = vsub.s32 0, %v108
    %v110 = vrot.slane %v105, %v109
    %v120 = vunpack.c.l.b16 %v81
    %v121 = vunpack.c.l.b16 %v82
    %v122 = vunpack.c.l.b16 %v83
    %v123 = vunpack.c.l.b16 %v84
    %v124 = vunpack.c.l.b16 %v85
    %v125 = vunpack.c.l.b16 %v86
    %v126 = vunpack.c.l.b16 %v87
    %v127 = vunpack.c.l.b16 %v88
    %v128 = vpack.c.b16 %v121, %v120
    %v129 = vpack.c.b16 %v123, %v122
    %v130 = vpack.c.b16 %v125, %v124
    %v131 = vpack.c.b16 %v127, %v126
    %v152 = vunpack.c.l.b16 %v89
    %v153 = vunpack.c.l.b16 %v90
    %v154 = vunpack.c.l.b16 %v91
    %v155 = vunpack.c.l.b16 %v92
    %v156 = vunpack.c.l.b16 %v93
    %v157 = vunpack.c.l.b16 %v94
    %v158 = vunpack.c.l.b16 %v95
    %v159 = vunpack.c.l.b16 %v96
    %v160 = vunpack.c.l.b16 %v97
    %v161 = vunpack.c.l.b16 %v98
    %v162 = vunpack.c.l.b16 %v99
    %v163 = vunpack.c.l.b16 %v100
    %v164 = vunpack.c.l.b16 %v101
    %v165 = vunpack.c.l.b16 %v102
    %v166 = vunpack.c.l.b16 %v103
    %v167 = vunpack.c.l.b16 %v104
    %v168 = vpack.c.b16 %v153, %v152
    %v169 = vpack.c.b16 %v155, %v154
    %v170 = vpack.c.b16 %v157, %v156
    %v171 = vpack.c.b16 %v159, %v158
    %v172 = vpack.c.b16 %v161, %v160
    %v173 = vpack.c.b16 %v163, %v162
    %v174 = vpack.c.b16 %v165, %v164
    %v175 = vpack.c.b16 %v167, %v166
    %184 = vmatprep.subr.bf16.mxu0 0
    %185 = vmatpush1.bf16.msra.mxu0 %v168
    %186 = vmatprep.subr.bf16.mxu0 0
    %187 = vmatpush1.bf16.msra.mxu0 %v169
    %188 = vmatprep.subr.bf16.mxu0 0
    %189 = vmatpush1.bf16.msra.mxu0 %v170
    %190 = vmatprep.subr.bf16.mxu0 0
    %191 = vmatpush1.bf16.msra.mxu0 %v171
    %192 = vmatprep.subr.bf16.mxu0 0
    %193 = vmatpush1.bf16.msra.mxu0 %v172
    %194 = vmatprep.subr.bf16.mxu0 0
    %195 = vmatpush1.bf16.msra.mxu0 %v173
    %196 = vmatprep.subr.bf16.mxu0 0
    %197 = vmatpush1.bf16.msra.mxu0 %v174
    %198 = vmatprep.subr.bf16.mxu0 0
    %199 = vmatpush1.bf16.msra.mxu0 %v175
    %200 = vmatprep.subr.bf16.mxu0 0
    %201 = vmatpush1.bf16.msra.mxu0 0
    %202 = vmatprep.subr.bf16.mxu0 0
    %203 = vmatpush1.bf16.msra.mxu0 0
    %204 = vmatprep.subr.bf16.mxu0 0
    %205 = vmatpush1.bf16.msra.mxu0 0
    %206 = vmatprep.subr.bf16.mxu0 0
    %207 = vmatpush1.bf16.msra.mxu0 0
    %208 = vmatprep.subr.bf16.mxu0 0
    %209 = vmatpush1.bf16.msra.mxu0 0
    %210 = vmatprep.subr.bf16.mxu0 0
    %211 = vmatpush1.bf16.msra.mxu0 0
    %212 = vmatprep.subr.bf16.mxu0 0
    %213 = vmatpush1.bf16.msra.mxu0 0
    %214 = vmatprep.subr.bf16.mxu0 0
    %215 = vmatpush1.bf16.msra.mxu0 0
    %216 = vmatprep.mubr.bf16.mxu0 0
    %217 = vmatmul.mubr.bf16.gmra.mrb[0].mxu0 %v128
    %v218 = vpop.f32.mrb[0].mxu0
    %v219 = vadd.f32 %v110, %v218
    %v220 = vpop.f32.mrb[0].mxu0
    %v221 = vpop.f32.mrb[0].mxu0
    %v222 = vadd.f32 %v110, %v221
    %v223 = vpop.f32.mrb[0].mxu0
    %224 = vmatprep.mubr.bf16.mxu0 0
    %225 = vmatmul.mubr.bf16.gmra.mrb[0].mxu0 %v129
    %v226 = vpop.f32.mrb[0].mxu0
    %v227 = vadd.f32 %v110, %v226
    %v228 = vpop.f32.mrb[0].mxu0
    %v229 = vpop.f32.mrb[0].mxu0
    %v230 = vadd.f32 %v110, %v229
    %v231 = vpop.f32.mrb[0].mxu0
    %232 = vmatprep.mubr.bf16.mxu0 0
    %233 = vmatmul.mubr.bf16.gmra.mrb[0].mxu0 %v130
    %v234 = vpop.f32.mrb[0].mxu0
    %v235 = vadd.f32 %v110, %v234
    %v236 = vpop.f32.mrb[0].mxu0
    %v237 = vpop.f32.mrb[0].mxu0
    %v238 = vadd.f32 %v110, %v237
    %v239 = vpop.f32.mrb[0].mxu0
    %240 = vmatprep.mubr.bf16.mxu0 0
    %241 = vmatmul.mubr.bf16.gmra.mrb[0].mxu0 %v131
    %v242 = vpop.f32.mrb[0].mxu0
    %v243 = vadd.f32 %v110, %v242
    %v244 = vpop.f32.mrb[0].mxu0
    %v245 = vpop.f32.mrb[0].mxu0
    %v246 = vadd.f32 %v110, %v245
    %v247 = vpop.f32.mrb[0].mxu0
    %248 = vdwg.mxu0
    %249 = vst [vmem:[#allocation3] sm:$0xff] %v219
    %250 = vst [vmem:[#allocation3 + $0x8] sm:$0xff] %v222
    %251 = vst [vmem:[#allocation3 + $0x10] sm:$0xff] %v227
    %252 = vst [vmem:[#allocation3 + $0x18] sm:$0xff] %v230
    %253 = vst [vmem:[#allocation3 + $0x20] sm:$0xff] %v235
    %254 = vst [vmem:[#allocation3 + $0x28] sm:$0xff] %v238
    %255 = vst [vmem:[#allocation3 + $0x30] sm:$0xff] %v243
    %256 = vst [vmem:[#allocation3 + $0x38] sm:$0xff] %v246
    %v257 = vld [vmem:[#allocation10] sm:$0xf]
    %v258 = vld [vmem:[#allocation10 + $0x4] sm:$0xf]
    %v259 = vld [vmem:[#allocation10 + $0x8] sm:$0xf]
    %v260 = vld [vmem:[#allocation10 + $0xc] sm:$0xf]
    %v261 = vld [vmem:[#allocation10 + $0x10] sm:$0xf]
    %v262 = vld [vmem:[#allocation10 + $0x14] sm:$0xf]
    %v263 = vld [vmem:[#allocation10 + $0x18] sm:$0xf]
    %v264 = vld [vmem:[#allocation10 + $0x1c] sm:$0xf]
    %v265 = vld [vmem:[#allocation10 + $0x20] sm:$0xf]
    %v266 = vld [vmem:[#allocation10 + $0x24] sm:$0xf]
    %v267 = vld [vmem:[#allocation10 + $0x28] sm:$0xf]
    %v268 = vld [vmem:[#allocation10 + $0x2c] sm:$0xf]
    %v269 = vld [vmem:[#allocation10 + $0x30] sm:$0xf]
    %v270 = vld [vmem:[#allocation10 + $0x34] sm:$0xf]
    %v271 = vld [vmem:[#allocation10 + $0x38] sm:$0xf]
    %v272 = vld [vmem:[#allocation10 + $0x3c] sm:$0xf]
    %s273 = smul.u32 0, 8
    %s274 = ssub.s32 8, %s273
    %v275 = vld [vmem:[#allocation2] sm:$0xff]
    %v276 = vld [vmem:[#allocation3] sm:$0xff]
    %v277 = vpack.c.bf16 %v275, %v275
    %v294 = vunpack.c.l.b16 %v257
    %v295 = vunpack.c.l.b16 %v258
    %v296 = vunpack.c.l.b16 %v259
    %v297 = vunpack.c.l.b16 %v260
    %v298 = vunpack.c.l.b16 %v261
    %v299 = vunpack.c.l.b16 %v262
    %v300 = vunpack.c.l.b16 %v263
    %v301 = vunpack.c.l.b16 %v264
    %v302 = vunpack.c.l.b16 %v265
    %v303 = vunpack.c.l.b16 %v266
    %v304 = vunpack.c.l.b16 %v267
    %v305 = vunpack.c.l.b16 %v268
    %v306 = vunpack.c.l.b16 %v269
    %v307 = vunpack.c.l.b16 %v270
    %v308 = vunpack.c.l.b16 %v271
    %v309 = vunpack.c.l.b16 %v272
    %v310 = vpack.c.b16 %v295, %v294
    %v311 = vpack.c.b16 %v297, %v296
    %v312 = vpack.c.b16 %v299, %v298
    %v313 = vpack.c.b16 %v301, %v300
    %v314 = vpack.c.b16 %v303, %v302
    %v315 = vpack.c.b16 %v305, %v304
    %v316 = vpack.c.b16 %v307, %v306
    %v317 = vpack.c.b16 %v309, %v308
    %326 = vmatprep.subr.bf16.mxu0 0
    %327 = vmatpush1.bf16.msra.mxu0 %v310
    %328 = vmatprep.subr.bf16.mxu0 0
    %329 = vmatpush1.bf16.msra.mxu0 %v311
    %330 = vmatprep.subr.bf16.mxu0 0
    %331 = vmatpush1.bf16.msra.mxu0 %v312
    %332 = vmatprep.subr.bf16.mxu0 0
    %333 = vmatpush1.bf16.msra.mxu0 %v313
    %334 = vmatprep.subr.bf16.mxu0 0
    %335 = vmatpush1.bf16.msra.mxu0 %v314
    %336 = vmatprep.subr.bf16.mxu0 0
    %337 = vmatpush1.bf16.msra.mxu0 %v315
    %338 = vmatprep.subr.bf16.mxu0 0
    %339 = vmatpush1.bf16.msra.mxu0 %v316
    %340 = vmatprep.subr.bf16.mxu0 0
    %341 = vmatpush1.bf16.msra.mxu0 %v317
    %342 = vmatprep.subr.bf16.mxu0 0
    %343 = vmatpush1.bf16.msra.mxu0 0
    %344 = vmatprep.subr.bf16.mxu0 0
    %345 = vmatpush1.bf16.msra.mxu0 0
    %346 = vmatprep.subr.bf16.mxu0 0
    %347 = vmatpush1.bf16.msra.mxu0 0
    %348 = vmatprep.subr.bf16.mxu0 0
    %349 = vmatpush1.bf16.msra.mxu0 0
    %350 = vmatprep.subr.bf16.mxu0 0
    %351 = vmatpush1.bf16.msra.mxu0 0
    %352 = vmatprep.subr.bf16.mxu0 0
    %353 = vmatpush1.bf16.msra.mxu0 0
    %354 = vmatprep.subr.bf16.mxu0 0
    %355 = vmatpush1.bf16.msra.mxu0 0
    %356 = vmatprep.subr.bf16.mxu0 0
    %357 = vmatpush1.bf16.msra.mxu0 0
    %358 = vmatprep.mubr.bf16.mxu0 0
    %359 = vmatmul.mubr.bf16.gmra.mrb[0].mxu0 %v277
    %v360 = vpop.f32.mrb[0].mxu0
    %v361 = vadd.f32 0.0, %v360
    %v362 = vpop.f32.mrb[0].mxu0
    %v363 = vpop.f32.mrb[0].mxu0
    %v364 = vpop.f32.mrb[0].mxu0
    %365 = vdwg.mxu0
    %v366 = vadd.f32 %v276, %v361
    %v367 = vtanh.pop %v366
    %p368 = scmp.gt.s32.totalorder %s274, 0
    %s369 = scalar_select %p368, 1, 0
    %v370 = vstv %s369
    %vm371 = vcmp.eq.s32.totalorder %v370, 1
    %v372 = vsel %vm371, %v367, %v275
    %s373 = scalar_lea.vmem [#allocation3], 8
    %v374 = vld [vmem:[%s373] sm:$0xff]
    %v375 = vpack.c.bf16 %v372, %v372
    %376 = vmatprep.subr.bf16.mxu0 0
    %377 = vmatpush1.bf16.msra.mxu0 %v310
    %378 = vmatprep.subr.bf16.mxu0 0
    %379 = vmatpush1.bf16.msra.mxu0 %v311
    %380 = vmatprep.subr.bf16.mxu0 0
    %381 = vmatpush1.bf16.msra.mxu0 %v312
    %382 = vmatprep.subr.bf16.mxu0 0
    %383 = vmatpush1.bf16.msra.mxu0 %v313
    %384 = vmatprep.subr.bf16.mxu0 0
    %385 = vmatpush1.bf16.msra.mxu0 %v314
    %386 = vmatprep.subr.bf16.mxu0 0
    %387 = vmatpush1.bf16.msra.mxu0 %v315
    %388 = vmatprep.subr.bf16.mxu0 0
    %389 = vmatpush1.bf16.msra.mxu0 %v316
    %390 = vmatprep.subr.bf16.mxu0 0
    %391 = vmatpush1.bf16.msra.mxu0 %v317
    %392 = vmatprep.subr.bf16.mxu0 0
    %393 = vmatpush1.bf16.msra.mxu0 0
    %394 = vmatprep.subr.bf16.mxu0 0
    %395 = vmatpush1.bf16.msra.mxu0 0
    %396 = vmatprep.subr.bf16.mxu0 0
    %397 = vmatpush1.bf16.msra.mxu0 0
    %398 = vmatprep.subr.bf16.mxu0 0
    %399 = vmatpush1.bf16.msra.mxu0 0
    %400 = vmatprep.subr.bf16.mxu0 0
    %401 = vmatpush1.bf16.msra.mxu0 0
    %402 = vmatprep.subr.bf16.mxu0 0
    %403 = vmatpush1.bf16.msra.mxu0 0
    %404 = vmatprep.subr.bf16.mxu0 0
    %405 = vmatpush1.bf16.msra.mxu0 0
    %406 = vmatprep.subr.bf16.mxu0 0
    %407 = vmatpush1.bf16.msra.mxu0 0
    %408 = vmatprep.mubr.bf16.mxu0 0
    %409 = vmatmul.mubr.bf16.gmra.mrb[0].mxu0 %v375
    %v410 = vpop.f32.mrb[0].mxu0
    %v411 = vadd.f32 0.0, %v410
    %v412 = vpop.f32.mrb[0].mxu0
    %v413 = vpop.f32.mrb[0].mxu0
    %v414 = vpop.f32.mrb[0].mxu0
    %415 = vdwg.mxu0
    %v416 = vadd.f32 %v374, %v411
    %v417 = vtanh.pop %v416
    %p418 = scmp.gt.s32.totalorder %s274, 1
    %s419 = scalar_select %p418, 1, 0
    %v420 = vstv %s419
    %vm421 = vcmp.eq.s32.totalorder %v420, 1
    %v422 = vsel %vm421, %v417, %v372
    %s423 = scalar_lea.vmem [#allocation3], 16
    %v424 = vld [vmem:[%s423] sm:$0xff]
    %v425 = vpack.c.bf16 %v422, %v422
    %426 = vmatprep.subr.bf16.mxu0 0
    %427 = vmatpush1.bf16.msra.mxu0 %v310
    %428 = vmatprep.subr.bf16.mxu0 0
    %429 = vmatpush1.bf16.msra.mxu0 %v311
    %430 = vmatprep.subr.bf16.mxu0 0
    %431 = vmatpush1.bf16.msra.mxu0 %v312
    %432 = vmatprep.subr.bf16.mxu0 0
    %433 = vmatpush1.bf16.msra.mxu0 %v313
    %434 = vmatprep.subr.bf16.mxu0 0
    %435 = vmatpush1.bf16.msra.mxu0 %v314
    %436 = vmatprep.subr.bf16.mxu0 0
    %437 = vmatpush1.bf16.msra.mxu0 %v315
    %438 = vmatprep.subr.bf16.mxu0 0
    %439 = vmatpush1.bf16.msra.mxu0 %v316
    %440 = vmatprep.subr.bf16.mxu0 0
    %441 = vmatpush1.bf16.msra.mxu0 %v317
    %442 = vmatprep.subr.bf16.mxu0 0
    %443 = vmatpush1.bf16.msra.mxu0 0
    %444 = vmatprep.subr.bf16.mxu0 0
    %445 = vmatpush1.bf16.msra.mxu0 0
    %446 = vmatprep.subr.bf16.mxu0 0
    %447 = vmatpush1.bf16.msra.mxu0 0
    %448 = vmatprep.subr.bf16.mxu0 0
    %449 = vmatpush1.bf16.msra.mxu0 0
    %450 = vmatprep.subr.bf16.mxu0 0
    %451 = vmatpush1.bf16.msra.mxu0 0
    %452 = vmatprep.subr.bf16.mxu0 0
    %453 = vmatpush1.bf16.msra.mxu0 0
    %454 = vmatprep.subr.bf16.mxu0 0
    %455 = vmatpush1.bf16.msra.mxu0 0
    %456 = vmatprep.subr.bf16.mxu0 0
    %457 = vmatpush1.bf16.msra.mxu0 0
    %458 = vmatprep.mubr.bf16.mxu0 0
    %459 = vmatmul.mubr.bf16.gmra.mrb[0].mxu0 %v425
    %v460 = vpop.f32.mrb[0].mxu0
    %v461 = vadd.f32 0.0, %v460
    %v462 = vpop.f32.mrb[0].mxu0
    %v463 = vpop.f32.mrb[0].mxu0
    %v464 = vpop.f32.mrb[0].mxu0
    %465 = vdwg.mxu0
    %v466 = vadd.f32 %v424, %v461
    %v467 = vtanh.pop %v466
    %p468 = scmp.gt.s32.totalorder %s274, 2
    %s469 = scalar_select %p468, 1, 0
    %v470 = vstv %s469
    %vm471 = vcmp.eq.s32.totalorder %v470, 1
    %v472 = vsel %vm471, %v467, %v422
    %s473 = scalar_lea.vmem [#allocation3], 24
    %v474 = vld [vmem:[%s473] sm:$0xff]
    %v475 = vpack.c.bf16 %v472, %v472
    %476 = vmatprep.subr.bf16.mxu0 0
    %477 = vmatpush1.bf16.msra.mxu0 %v310
    %478 = vmatprep.subr.bf16.mxu0 0
    %479 = vmatpush1.bf16.msra.mxu0 %v311
    %480 = vmatprep.subr.bf16.mxu0 0
    %481 = vmatpush1.bf16.msra.mxu0 %v312
    %482 = vmatprep.subr.bf16.mxu0 0
    %483 = vmatpush1.bf16.msra.mxu0 %v313
    %484 = vmatprep.subr.bf16.mxu0 0
    %485 = vmatpush1.bf16.msra.mxu0 %v314
    %486 = vmatprep.subr.bf16.mxu0 0
    %487 = vmatpush1.bf16.msra.mxu0 %v315
    %488 = vmatprep.subr.bf16.mxu0 0
    %489 = vmatpush1.bf16.msra.mxu0 %v316
    %490 = vmatprep.subr.bf16.mxu0 0
    %491 = vmatpush1.bf16.msra.mxu0 %v317
    %492 = vmatprep.subr.bf16.mxu0 0
    %493 = vmatpush1.bf16.msra.mxu0 0
    %494 = vmatprep.subr.bf16.mxu0 0
    %495 = vmatpush1.bf16.msra.mxu0 0
    %496 = vmatprep.subr.bf16.mxu0 0
    %497 = vmatpush1.bf16.msra.mxu0 0
    %498 = vmatprep.subr.bf16.mxu0 0
    %499 = vmatpush1.bf16.msra.mxu0 0
    %500 = vmatprep.subr.bf16.mxu0 0
    %501 = vmatpush1.bf16.msra.mxu0 0
    %502 = vmatprep.subr.bf16.mxu0 0
    %503 = vmatpush1.bf16.msra.mxu0 0
    %504 = vmatprep.subr.bf16.mxu0 0
    %505 = vmatpush1.bf16.msra.mxu0 0
    %506 = vmatprep.subr.bf16.mxu0 0
    %507 = vmatpush1.bf16.msra.mxu0 0
    %508 = vmatprep.mubr.bf16.mxu0 0
    %509 = vmatmul.mubr.bf16.gmra.mrb[0].mxu0 %v475
    %v510 = vpop.f32.mrb[0].mxu0
    %v511 = vadd.f32 0.0, %v510
    %v512 = vpop.f32.mrb[0].mxu0
    %v513 = vpop.f32.mrb[0].mxu0
    %v514 = vpop.f32.mrb[0].mxu0
    %515 = vdwg.mxu0
    %v516 = vadd.f32 %v474, %v511
    %v517 = vtanh.pop %v516
    %p518 = scmp.gt.s32.totalorder %s274, 3
    %s519 = scalar_select %p518, 1, 0
    %v520 = vstv %s519
    %vm521 = vcmp.eq.s32.totalorder %v520, 1
    %v522 = vsel %vm521, %v517, %v472
    %s523 = scalar_lea.vmem [#allocation3], 32
    %v524 = vld [vmem:[%s523] sm:$0xff]
    %v525 = vpack.c.bf16 %v522, %v522
    %526 = vmatprep.subr.bf16.mxu0 0
    %527 = vmatpush1.bf16.msra.mxu0 %v310
    %528 = vmatprep.subr.bf16.mxu0 0
    %529 = vmatpush1.bf16.msra.mxu0 %v311
    %530 = vmatprep.subr.bf16.mxu0 0
    %531 = vmatpush1.bf16.msra.mxu0 %v312
    %532 = vmatprep.subr.bf16.mxu0 0
    %533 = vmatpush1.bf16.msra.mxu0 %v313
    %534 = vmatprep.subr.bf16.mxu0 0
    %535 = vmatpush1.bf16.msra.mxu0 %v314
    %536 = vmatprep.subr.bf16.mxu0 0
    %537 = vmatpush1.bf16.msra.mxu0 %v315
    %538 = vmatprep.subr.bf16.mxu0 0
    %539 = vmatpush1.bf16.msra.mxu0 %v316
    %540 = vmatprep.subr.bf16.mxu0 0
    %541 = vmatpush1.bf16.msra.mxu0 %v317
    %542 = vmatprep.subr.bf16.mxu0 0
    %543 = vmatpush1.bf16.msra.mxu0 0
    %544 = vmatprep.subr.bf16.mxu0 0
    %545 = vmatpush1.bf16.msra.mxu0 0
    %546 = vmatprep.subr.bf16.mxu0 0
    %547 = vmatpush1.bf16.msra.mxu0 0
    %548 = vmatprep.subr.bf16.mxu0 0
    %549 = vmatpush1.bf16.msra.mxu0 0
    %550 = vmatprep.subr.bf16.mxu0 0
    %551 = vmatpush1.bf16.msra.mxu0 0
    %552 = vmatprep.subr.bf16.mxu0 0
    %553 = vmatpush1.bf16.msra.mxu0 0
    %554 = vmatprep.subr.bf16.mxu0 0
    %555 = vmatpush1.bf16.msra.mxu0 0
    %556 = vmatprep.subr.bf16.mxu0 0
    %557 = vmatpush1.bf16.msra.mxu0 0
    %558 = vmatprep.mubr.bf16.mxu0 0
    %559 = vmatmul.mubr.bf16.gmra.mrb[0].mxu0 %v525
    %v560 = vpop.f32.mrb[0].mxu0
    %v561 = vadd.f32 0.0, %v560
    %v562 = vpop.f32.mrb[0].mxu0
    %v563 = vpop.f32.mrb[0].mxu0
    %v564 = vpop.f32.mrb[0].mxu0
    %565 = vdwg.mxu0
    %v566 = vadd.f32 %v524, %v561
    %v567 = vtanh.pop %v566
    %p568 = scmp.gt.s32.totalorder %s274, 4
    %s569 = scalar_select %p568, 1, 0
    %v570 = vstv %s569
    %vm571 = vcmp.eq.s32.totalorder %v570, 1
    %v572 = vsel %vm571, %v567, %v522
    %s573 = scalar_lea.vmem [#allocation3], 40
    %v574 = vld [vmem:[%s573] sm:$0xff]
    %v575 = vpack.c.bf16 %v572, %v572
    %576 = vmatprep.subr.bf16.mxu0 0
    %577 = vmatpush1.bf16.msra.mxu0 %v310
    %578 = vmatprep.subr.bf16.mxu0 0
    %579 = vmatpush1.bf16.msra.mxu0 %v311
    %580 = vmatprep.subr.bf16.mxu0 0
    %581 = vmatpush1.bf16.msra.mxu0 %v312
    %582 = vmatprep.subr.bf16.mxu0 0
    %583 = vmatpush1.bf16.msra.mxu0 %v313
    %584 = vmatprep.subr.bf16.mxu0 0
    %585 = vmatpush1.bf16.msra.mxu0 %v314
    %586 = vmatprep.subr.bf16.mxu0 0
    %587 = vmatpush1.bf16.msra.mxu0 %v315
    %588 = vmatprep.subr.bf16.mxu0 0
    %589 = vmatpush1.bf16.msra.mxu0 %v316
    %590 = vmatprep.subr.bf16.mxu0 0
    %591 = vmatpush1.bf16.msra.mxu0 %v317
    %592 = vmatprep.subr.bf16.mxu0 0
    %593 = vmatpush1.bf16.msra.mxu0 0
    %594 = vmatprep.subr.bf16.mxu0 0
    %595 = vmatpush1.bf16.msra.mxu0 0
    %596 = vmatprep.subr.bf16.mxu0 0
    %597 = vmatpush1.bf16.msra.mxu0 0
    %598 = vmatprep.subr.bf16.mxu0 0
    %599 = vmatpush1.bf16.msra.mxu0 0
    %600 = vmatprep.subr.bf16.mxu0 0
    %601 = vmatpush1.bf16.msra.mxu0 0
    %602 = vmatprep.subr.bf16.mxu0 0
    %603 = vmatpush1.bf16.msra.mxu0 0
    %604 = vmatprep.subr.bf16.mxu0 0
    %605 = vmatpush1.bf16.msra.mxu0 0
    %606 = vmatprep.subr.bf16.mxu0 0
    %607 = vmatpush1.bf16.msra.mxu0 0
    %608 = vmatprep.mubr.bf16.mxu0 0
    %609 = vmatmul.mubr.bf16.gmra.mrb[0].mxu0 %v575
    %v610 = vpop.f32.mrb[0].mxu0
    %v611 = vadd.f32 0.0, %v610
    %v612 = vpop.f32.mrb[0].mxu0
    %v613 = vpop.f32.mrb[0].mxu0
    %v614 = vpop.f32.mrb[0].mxu0
    %615 = vdwg.mxu0
    %v616 = vadd.f32 %v574, %v611
    %v617 = vtanh.pop %v616
    %p618 = scmp.gt.s32.totalorder %s274, 5
    %s619 = scalar_select %p618, 1, 0
    %v620 = vstv %s619
    %vm621 = vcmp.eq.s32.totalorder %v620, 1
    %v622 = vsel %vm621, %v617, %v572
    %s623 = scalar_lea.vmem [#allocation3], 48
    %v624 = vld [vmem:[%s623] sm:$0xff]
    %v625 = vpack.c.bf16 %v622, %v622
    %626 = vmatprep.subr.bf16.mxu0 0
    %627 = vmatpush1.bf16.msra.mxu0 %v310
    %628 = vmatprep.subr.bf16.mxu0 0
    %629 = vmatpush1.bf16.msra.mxu0 %v311
    %630 = vmatprep.subr.bf16.mxu0 0
    %631 = vmatpush1.bf16.msra.mxu0 %v312
    %632 = vmatprep.subr.bf16.mxu0 0
    %633 = vmatpush1.bf16.msra.mxu0 %v313
    %634 = vmatprep.subr.bf16.mxu0 0
    %635 = vmatpush1.bf16.msra.mxu0 %v314
    %636 = vmatprep.subr.bf16.mxu0 0
    %637 = vmatpush1.bf16.msra.mxu0 %v315
    %638 = vmatprep.subr.bf16.mxu0 0
    %639 = vmatpush1.bf16.msra.mxu0 %v316
    %640 = vmatprep.subr.bf16.mxu0 0
    %641 = vmatpush1.bf16.msra.mxu0 %v317
    %642 = vmatprep.subr.bf16.mxu0 0
    %643 = vmatpush1.bf16.msra.mxu0 0
    %644 = vmatprep.subr.bf16.mxu0 0
    %645 = vmatpush1.bf16.msra.mxu0 0
    %646 = vmatprep.subr.bf16.mxu0 0
    %647 = vmatpush1.bf16.msra.mxu0 0
    %648 = vmatprep.subr.bf16.mxu0 0
    %649 = vmatpush1.bf16.msra.mxu0 0
    %650 = vmatprep.subr.bf16.mxu0 0
    %651 = vmatpush1.bf16.msra.mxu0 0
    %652 = vmatprep.subr.bf16.mxu0 0
    %653 = vmatpush1.bf16.msra.mxu0 0
    %654 = vmatprep.subr.bf16.mxu0 0
    %655 = vmatpush1.bf16.msra.mxu0 0
    %656 = vmatprep.subr.bf16.mxu0 0
    %657 = vmatpush1.bf16.msra.mxu0 0
    %658 = vmatprep.mubr.bf16.mxu0 0
    %659 = vmatmul.mubr.bf16.gmra.mrb[0].mxu0 %v625
    %v660 = vpop.f32.mrb[0].mxu0
    %v661 = vadd.f32 0.0, %v660
    %v662 = vpop.f32.mrb[0].mxu0
    %v663 = vpop.f32.mrb[0].mxu0
    %v664 = vpop.f32.mrb[0].mxu0
    %665 = vdwg.mxu0
    %v666 = vadd.f32 %v624, %v661
    %v667 = vtanh.pop %v666
    %p668 = scmp.gt.s32.totalorder %s274, 6
    %s669 = scalar_select %p668, 1, 0
    %v670 = vstv %s669
    %vm671 = vcmp.eq.s32.totalorder %v670, 1
    %v672 = vsel %vm671, %v667, %v622
    %s673 = scalar_lea.vmem [#allocation3], 56
    %v674 = vld [vmem:[%s673] sm:$0xff]
    %v675 = vpack.c.bf16 %v672, %v672
    %676 = vmatprep.subr.bf16.mxu0 0
    %677 = vmatpush1.bf16.msra.mxu0 %v310
    %678 = vmatprep.subr.bf16.mxu0 0
    %679 = vmatpush1.bf16.msra.mxu0 %v311
    %680 = vmatprep.subr.bf16.mxu0 0
    %681 = vmatpush1.bf16.msra.mxu0 %v312
    %682 = vmatprep.subr.bf16.mxu0 0
    %683 = vmatpush1.bf16.msra.mxu0 %v313
    %684 = vmatprep.subr.bf16.mxu0 0
    %685 = vmatpush1.bf16.msra.mxu0 %v314
    %686 = vmatprep.subr.bf16.mxu0 0
    %687 = vmatpush1.bf16.msra.mxu0 %v315
    %688 = vmatprep.subr.bf16.mxu0 0
    %689 = vmatpush1.bf16.msra.mxu0 %v316
    %690 = vmatprep.subr.bf16.mxu0 0
    %691 = vmatpush1.bf16.msra.mxu0 %v317
    %692 = vmatprep.subr.bf16.mxu0 0
    %693 = vmatpush1.bf16.msra.mxu0 0
    %694 = vmatprep.subr.bf16.mxu0 0
    %695 = vmatpush1.bf16.msra.mxu0 0
    %696 = vmatprep.subr.bf16.mxu0 0
    %697 = vmatpush1.bf16.msra.mxu0 0
    %698 = vmatprep.subr.bf16.mxu0 0
    %699 = vmatpush1.bf16.msra.mxu0 0
    %700 = vmatprep.subr.bf16.mxu0 0
    %701 = vmatpush1.bf16.msra.mxu0 0
    %702 = vmatprep.subr.bf16.mxu0 0
    %703 = vmatpush1.bf16.msra.mxu0 0
    %704 = vmatprep.subr.bf16.mxu0 0
    %705 = vmatpush1.bf16.msra.mxu0 0
    %706 = vmatprep.subr.bf16.mxu0 0
    %707 = vmatpush1.bf16.msra.mxu0 0
    %708 = vmatprep.mubr.bf16.mxu0 0
    %709 = vmatmul.mubr.bf16.gmra.mrb[0].mxu0 %v675
    %v710 = vpop.f32.mrb[0].mxu0
    %v711 = vadd.f32 0.0, %v710
    %v712 = vpop.f32.mrb[0].mxu0
    %v713 = vpop.f32.mrb[0].mxu0
    %v714 = vpop.f32.mrb[0].mxu0
    %715 = vdwg.mxu0
    %v716 = vadd.f32 %v674, %v711
    %v717 = vtanh.pop %v716
    %p718 = scmp.gt.s32.totalorder %s274, 7
    %s719 = scalar_select %p718, 1, 0
    %v720 = vstv %s719
    %vm721 = vcmp.eq.s32.totalorder %v720, 1
    %v722 = vsel %vm721, %v717, %v672
    %723 = vst [vmem:[#allocation2] sm:$0xff] %v722
    // Predicated region
    $region42: #{tpu_custom_call.1} parent=1 // pred_check
      %p724 = pneg %p75
    $region43: #{tpu_custom_call.1} parent=1 // pred_check_branch
      %726 = sbr.rel (%p724) target = $region45
    $region44: #{tpu_custom_call.1} parent=1 // pred_region
      %727 = vst [vmem:[#allocation12] sm:$0xff] %v722
    $region45: #{tpu_custom_call.1} parent=1 // pred_fallthru
      _
    // Predicated region
    $region46: #{tpu_custom_call.1} parent=1 // pred_check
      _
    $region47: #{tpu_custom_call.1} parent=1 // pred_check_branch
      %729 = sbr.rel (0) target = $region49
    $region48: #{tpu_custom_call.1} parent=1 // pred_region
      %s731 = ssub.s32 128, 128
      %732 = vsyncadd [#allocation6], %s731
      %s734 = sshll.u32 [#allocation12], 4
      %s735 = int_to_ptr.vmem [resolvable:$true] %s734
      %737 = dma.vmem_to_hbm [thread:$0]  %s735, 128, %s5, [#allocation6]
    $region49: #{tpu_custom_call.1} parent=1 // pred_fallthru
      _
    // Predicated region
    $region50: #{tpu_custom_call.1} parent=1 // pred_check
      _
    $region51: #{tpu_custom_call.1} parent=1 // pred_check_branch
      %739 = sbr.rel (0) target = $region53
    $region52: #{tpu_custom_call.1} parent=1 // pred_region
      %740 = dma.done [#allocation6], 128
    $region53: #{tpu_custom_call.1} parent=1 // pred_fallthru
      _
    %741 = vsyncpa [#allocation5], 1
    %742 = vsyncpa [#allocation8], 1
    %743 = vsyncpa [#allocation11], 1
    %744 = vsyncpa [#allocation6], 1

</llo_original>
